<compile_context>
chip_gen: v6e
topology: v6e:2x2x1
jax: 0.10.0
libtpu: 0.0.40
codegen_flags: <defaults>
</compile_context>

<pallas_src>
import functools

import jax
import jax.numpy as jnp
from jax import lax
from jax.experimental import pallas as pl
from jax.experimental.pallas import tpu as pltpu


def _dg(a, b, dims):
    """2-D dot_general (MXU) with f32 accumulation, no batch dims."""
    return lax.dot_general(a, b, dimension_numbers=(dims, ((), ())),
                           preferred_element_type=jnp.float32)


def _full_spec(shape):
    """Whole-array block (legal regardless of (8,128) since it equals the array)."""
    nd = len(shape)
    return pl.BlockSpec(shape, lambda i, *_: (0,) * nd)


def _masked_mean_pool(table_ref, ans_ref, alen_ref, pool_scr, cnt_scr, b, L):
    """Masked mean of table rows gathered by SMEM token ids (in-kernel pool)."""
    pool_scr[...] = jnp.zeros_like(pool_scr)
    cnt_scr[...] = jnp.zeros_like(cnt_scr)
    n_b = alen_ref[b]
    for l in range(L):                      # static unroll, L is tiny
        @pl.when(l < n_b)
        def _():
            idx = ans_ref[b, l]
            pool_scr[...] += table_ref[pl.ds(idx, 1), :]
            cnt_scr[...] += 1.0
    return pool_scr[...] / jnp.maximum(cnt_scr[...], 1.0)


def _attention_tail(img_cf, q_b, out_w, qw_b):
    """scores -> softmax -> context -> vocab logits (transpose-free [C,F] layout)."""
    scores = _dg(q_b, img_cf, ((1,), (0,)))          # [T, F]
    m = jnp.max(scores, axis=-1, keepdims=True)
    e = jnp.exp(scores - m)
    s = jnp.sum(e, axis=-1, keepdims=True)
    alphas = e / s                                   # exact softmax (parity)
    ctx = _dg(alphas, img_cf, ((1,), (1,)))          # [T, C]
    logits = _dg(ctx, out_w, ((1,), (0,))) + qw_b    # q@Wout precomputed off-path
    return logits, alphas


# ------------------------- fused forward (no-SS path) ------------------------
def _fused_no_ss_kernel(cap_ref, ans_ref, alen_ref,                 # SMEM (prefetch)
                        x_ref, convw_ref, convb_ref, qtab_ref, aqtab_ref,
                        outw_ref, outb_ref,                          # VMEM inputs
                        preds_ref, alphas_ref,                       # outputs
                        q_scr, pool_scr, cnt_scr,                    # scratch
                        *, B, T, L):
    # ---- assemble packed queries q_scr[B*T, C] (in-kernel gathers) ----
    for b in range(B):
        # whole answer branch == masked mean of aq_table rows (Linear chains folded)
        aq_b = _masked_mean_pool(aqtab_ref, ans_ref, alen_ref,
                                 pool_scr, cnt_scr, b, L)            # [1, C]
        for t in range(T):
            cidx = cap_ref[b, t]
            q_scr[pl.ds(b * T + t, 1), :] = qtab_ref[pl.ds(cidx, 1), :] + aq_b

    # batch-packed vocab projection of the query part (better MXU fill, and
    # independent of the softmax chain)
    qw = _dg(q_scr[...], outw_ref[...], ((1,), (0,))) + outb_ref[...]   # [B*T, V]

    out_w = outw_ref[...]
    conv_w = convw_ref[...]
    conv_b = convb_ref[...]
    for b in range(B):
        # 1x1 conv == contraction over Cin; weight kept [out, in] so the
        # NCHW -> [B, F, C] permute of the reference is absorbed by dot layout.
        img_cf = _dg(conv_w, x_ref[b], ((1,), (0,))) + conv_b        # [C, F]
        q_b = q_scr[pl.ds(b * T, T), :]                              # [T, C]
        logits, alphas = _attention_tail(img_cf, q_b, out_w,
                                         qw[b * T:(b + 1) * T, :])
        preds_ref[b] = logits.astype(preds_ref.dtype)
        alphas_ref[b] = alphas.astype(alphas_ref.dtype)


def fused_forward_no_ss(captions, ans, alen, x, conv_wt, conv_b_col,
                        q_table, aq_table, out_w, out_b_row):
    B, Cin, F = x.shape
    T = captions.shape[1]
    L = ans.shape[1]
    C = conv_wt.shape[0]
    V = out_w.shape[1]
    kern = functools.partial(_fused_no_ss_kernel, B=B, T=T, L=L)
    grid_spec = pltpu.PrefetchScalarGridSpec(
        num_scalar_prefetch=3,               # captions, ans, alen -> SMEM
        grid=(1,),                           # single fused step (1 TC on v5e/v6e)
        in_specs=[
            _full_spec((B, Cin, F)),         # image features (unpadded F)
            _full_spec((C, Cin)),            # conv W [out, in]
            _full_spec((C, 1)),              # conv b column
            _full_spec(q_table.shape),       # word-query table [V, C]
            _full_spec(aq_table.shape),      # answer-query table [Va, C]
            _full_spec((C, V)),              # vocab head W
            _full_spec((1, V)),              # vocab head b
        ],
        out_specs=[
            _full_spec((B, T, V)),
            _full_spec((B, T, F)),
        ],
        scratch_shapes=[
            pltpu.VMEM((B * T, C), jnp.float32),   # packed queries
            pltpu.VMEM((1, C), jnp.float32),       # pooling accumulator
            pltpu.VMEM((1, 1), jnp.float32),       # pooling count
        ],
    )
    return pl.pallas_call(
        kern,
        grid_spec=grid_spec,
        out_shape=(jax.ShapeDtypeStruct((B, T, V), jnp.float32),
                   jax.ShapeDtypeStruct((B, T, F), jnp.float32)),
        compiler_params=pltpu.CompilerParams(
            dimension_semantics=("arbitrary",)),
    )(captions, ans, alen, x, conv_wt, conv_b_col, q_table, aq_table,
      out_w, out_b_row)


# -------------------------- fused forward (SS path) --------------------------
def _fused_ss_kernel(cap_ref, ans_ref, alen_ref,                     # SMEM (prefetch)
                     img_ref, ansemb_ref, answt_ref, ansb_ref,
                     answbt_ref, ansbb_ref, qtab_ref, outw_ref, outb_ref,
                     preds_ref, alphas_ref,
                     q_scr, pool_scr, cnt_scr,
                     *, B, T, L):
    # packed word queries (no answer term in the query for the SS path)
    for b in range(B):
        for t in range(T):
            cidx = cap_ref[b, t]
            q_scr[pl.ds(b * T + t, 1), :] = qtab_ref[pl.ds(cidx, 1), :]
    qw = _dg(q_scr[...], outw_ref[...], ((1,), (0,))) + outb_ref[...]    # [B*T, V]

    out_w = outw_ref[...]
    ans_wt = answt_ref[...]
    ans_wbt = answbt_ref[...]
    for b in range(B):
        # in-kernel masked mean pool of answer-token embeddings -> [1, Hans]
        pooled = _masked_mean_pool(ansemb_ref, ans_ref, alen_ref,
                                   pool_scr, cnt_scr, b, L)
        # scale/shift heads as broadcast-mul + lane reduction (weights stored
        # pre-transposed), giving [C, 1] columns with no runtime transpose.
        e_col = jnp.sum(ans_wt * pooled, axis=1, keepdims=True) + ansb_ref[...]
        bb_col = jnp.sum(ans_wbt * pooled, axis=1, keepdims=True) + ansbb_ref[...]
        # recast_answer_embeds + img.mul(embeds) + biases in [C, F] layout;
        # permute(0, 2, 1) of the reference is absorbed by the dot orientation.
        img_cf = img_ref[b] * e_col + bb_col                             # [C, F]
        q_b = q_scr[pl.ds(b * T, T), :]
        logits, alphas = _attention_tail(img_cf, q_b, out_w,
                                         qw[b * T:(b + 1) * T, :])
        preds_ref[b] = logits.astype(preds_ref.dtype)
        alphas_ref[b] = alphas.astype(alphas_ref.dtype)


def fused_forward_ss(captions, ans, alen, imgf, ans_emb, ans_wt, ans_b_col,
                     ans_wbt, ans_bb_col, q_table, out_w, out_b_row):
    B, C, F = imgf.shape
    T = captions.shape[1]
    L = ans.shape[1]
    Hans = ans_emb.shape[1]
    V = out_w.shape[1]
    kern = functools.partial(_fused_ss_kernel, B=B, T=T, L=L)
    grid_spec = pltpu.PrefetchScalarGridSpec(
        num_scalar_prefetch=3,
        grid=(1,),
        in_specs=[
            _full_spec((B, C, F)),           # image features (unpadded F)
            _full_spec(ans_emb.shape),       # answer embedding table [Va, Hans]
            _full_spec((C, Hans)),           # answer scale head W^T
            _full_spec((C, 1)),              # answer scale head b
            _full_spec((C, Hans)),           # answer shift head W^T
            _full_spec((C, 1)),              # answer shift head b
            _full_spec(q_table.shape),       # word-query table [V, C]
            _full_spec((C, V)),              # vocab head W
            _full_spec((1, V)),              # vocab head b
        ],
        out_specs=[
            _full_spec((B, T, V)),
            _full_spec((B, T, F)),
        ],
        scratch_shapes=[
            pltpu.VMEM((B * T, C), jnp.float32),
            pltpu.VMEM((1, Hans), jnp.float32),
            pltpu.VMEM((1, 1), jnp.float32),
        ],
    )
    return pl.pallas_call(
        kern,
        grid_spec=grid_spec,
        out_shape=(jax.ShapeDtypeStruct((B, T, V), jnp.float32),
                   jax.ShapeDtypeStruct((B, T, F), jnp.float32)),
        compiler_params=pltpu.CompilerParams(
            dimension_semantics=("arbitrary",)),
    )(captions, ans, alen, imgf, ans_emb, ans_wt, ans_b_col, ans_wbt,
      ans_bb_col, q_table, out_w, out_b_row)


# --------------------------------- model -------------------------------------
class VQGNetANS:
    """JAX/Pallas port of FSVQG VQGNetANS (decoder_type='lstm')."""

    def __init__(self, key, ans_vocab_size, ans_hidden_size, vocab_size,
                 side_embed_dim=16, encoder_dim=32, decoder_dim=16,
                 scale_shift=False):
        self.scale_shift = scale_shift
        self.encoder_dim = encoder_dim
        self.decoder_dim = decoder_dim
        self.vocab_size = vocab_size
        if not scale_shift:
            ans_encoder_dim = side_embed_dim
            num_channels = decoder_dim          # LSTM_Decoder num_channels
            self.img_feat_size = 7
        else:
            ans_encoder_dim = encoder_dim
            num_channels = encoder_dim
        self.num_channels = num_channels

        ks = jax.random.split(key, 10)

        def init(k, shape, scale=0.05):
            return jax.random.normal(k, shape, jnp.float32) * scale

        # raw parameters (mirroring the PyTorch module's parameterization)
        ans_emb = init(ks[0], (ans_vocab_size, ans_hidden_size))
        ans_w = init(ks[1], (ans_hidden_size, ans_encoder_dim))
        ans_b = jnp.zeros((ans_encoder_dim,), jnp.float32)
        word_emb = init(ks[5], (vocab_size, decoder_dim))
        q_w = init(ks[6], (decoder_dim, num_channels))
        q_b = jnp.zeros((1, num_channels), jnp.float32)
        out_w = init(ks[8], (num_channels, vocab_size))
        out_b = jnp.zeros((vocab_size,), jnp.float32)
        self.out_w = out_w                                   # [C, V] (unpadded)
        self.out_b_row = out_b.reshape(1, -1)                # [1, V]

        if not scale_shift:
            ansq_w = init(ks[7], (ans_encoder_dim, num_channels))
            # constant-folded answer branch:
            #   aq = mean_pool(ans_emb rows) @ ans_w @ ansq_w + ans_b @ ansq_w
            self.aq_table = (ans_emb @ ans_w) @ ansq_w       # [Va, C]
            aq_bias = (ans_b @ ansq_w).reshape(1, -1)        # folded into q_table
            # constant-folded word-query chain (embedding + Linear + const bias)
            self.q_table = word_emb @ q_w + q_b + aq_bias    # [V, C]
            # conv_net = nn.Conv2d(encoder_dim, num_channels, 1); weight kept
            # [out, in] so the kernel contracts Cin directly.
            self.conv_wt = init(ks[3], (num_channels, encoder_dim))
            self.conv_b_col = init(ks[4], (num_channels,)).reshape(-1, 1)
        else:
            ans_w_bias = init(ks[2], (ans_hidden_size, ans_encoder_dim))
            ans_b_bias = jnp.zeros((ans_encoder_dim,), jnp.float32)
            self.ans_emb = ans_emb                           # [Va, Hans]
            # stored pre-transposed so scale/shift come out as [C, 1] columns
            self.ans_wt = ans_w.T                            # [C, Hans]
            self.ans_b_col = ans_b.reshape(-1, 1)            # [C, 1]
            self.ans_wbt = ans_w_bias.T                      # [C, Hans]
            self.ans_bb_col = ans_b_bias.reshape(-1, 1)      # [C, 1]
            self.q_table = word_emb @ q_w + q_b              # [V, C]

    # TODO(synk): AnswerEncoder source is not in the reference; stand-in is an
    # embedding lookup + length-masked mean pool, run entirely in-kernel.
    # TODO(synk): LSTM_Decoder source is not in the reference; stand-in is a
    # teacher-forced per-timestep query + single-step attention decoder.
    def __call__(self, imgs, ans, alen, captions):
        captions = captions.astype(jnp.int32)
        ans = ans.astype(jnp.int32)
        alen = alen.astype(jnp.int32)
        if not self.scale_shift:
            # get_img_embeds_no_SS + answer encoder + decoder in one pallas_call.
            B, Cin, H, W = imgs.shape
            x = imgs.reshape(B, Cin, H * W)        # contiguous -> free reshape
            preds, alphas = fused_forward_no_ss(
                captions, ans, alen, x, self.conv_wt, self.conv_b_col,
                self.q_table, self.aq_table, self.out_w, self.out_b_row)
        else:
            # get_img_embeds (scale/shift) + answer encoder + decoder, fused.
            B = imgs.shape[0]
            imgf = imgs.reshape(B, self.encoder_dim, -1)   # batch-safe "squeeze"
            preds, alphas = fused_forward_ss(
                captions, ans, alen, imgf, self.ans_emb, self.ans_wt,
                self.ans_b_col, self.ans_wbt, self.ans_bb_col,
                self.q_table, self.out_w, self.out_b_row)
        return preds, alphas


# ----------------------------------- main -------------------------------------
if __name__ == "__main__":
    key = jax.random.PRNGKey(0)
    B, T, L = 2, 8, 6
    ans_vocab_size, ans_hidden_size, vocab_size = 40, 16, 50
    encoder_dim, decoder_dim, side_embed_dim = 32, 16, 16
    H = W = 7  # -> img_feat_size = 7, F = 49

    kimg, kans, kcap, kparam, kimg2 = jax.random.split(key, 5)
    imgs = jax.random.normal(kimg, (B, encoder_dim, H, W), jnp.float32)   # NCHW
    ans = jax.random.randint(kans, (B, L), 0, ans_vocab_size)
    alen = jnp.array([4, 6], dtype=jnp.int32)
    captions = jax.random.randint(kcap, (B, T), 0, vocab_size)

    # default branch: scale_shift=False, decoder_type='lstm' (1x1 conv_net)
    model = VQGNetANS(kparam, ans_vocab_size, ans_hidden_size, vocab_size,
                      side_embed_dim=side_embed_dim, encoder_dim=encoder_dim,
                      decoder_dim=decoder_dim, scale_shift=False)
    preds, alphas = model(imgs, ans, alen, captions)
    jax.block_until_ready((preds, alphas))
    assert preds.shape == (B, T, vocab_size)
    assert alphas.shape == (B, T, H * W)

    # scale_shift=True branch (recast_answer_embeds + mul + add + permute)
    model_ss = VQGNetANS(kparam, ans_vocab_size, ans_hidden_size, vocab_size,
                         side_embed_dim=side_embed_dim, encoder_dim=encoder_dim,
                         decoder_dim=decoder_dim, scale_shift=True)
    imgs_ss = jax.random.normal(kimg2, (B, encoder_dim, H * W), jnp.float32)
    preds_ss, alphas_ss = model_ss(imgs_ss, ans, alen, captions)
    jax.block_until_ready((preds_ss, alphas_ss))
    assert preds_ss.shape == (B, T, vocab_size)
    assert alphas_ss.shape == (B, T, H * W)

    print("KERNEL_OK")
</pallas_src>

<mosaic_0001>
module attributes {stable_mosaic.version = 11 : i64} {
  func.func @_fused_no_ss_kernel(%arg0: i32, %arg1: memref<2x8xi32, #tpu.memory_space<smem>>, %arg2: memref<2x6xi32, #tpu.memory_space<smem>>, %arg3: memref<2xi32, #tpu.memory_space<smem>>, %arg4: memref<2x32x49xf32, #tpu.memory_space<vmem>>, %arg5: memref<16x32xf32, #tpu.memory_space<vmem>>, %arg6: memref<16x1xf32, #tpu.memory_space<vmem>>, %arg7: memref<50x16xf32, #tpu.memory_space<vmem>>, %arg8: memref<40x16xf32, #tpu.memory_space<vmem>>, %arg9: memref<16x50xf32, #tpu.memory_space<vmem>>, %arg10: memref<1x50xf32, #tpu.memory_space<vmem>>, %arg11: memref<2x8x50xf32, #tpu.memory_space<vmem>>, %arg12: memref<2x8x49xf32, #tpu.memory_space<vmem>>, %arg13: memref<16x16xf32, #tpu.memory_space<vmem>>, %arg14: memref<1x16xf32, #tpu.memory_space<vmem>>, %arg15: memref<1x1xf32, #tpu.memory_space<vmem>>) attributes {dimension_semantics = [#tpu.dimension_semantics<arbitrary>], iteration_bounds = array<i64: 1>, scalar_prefetch = 3 : i64, scratch_operands = 3 : i64, tpu.core_type = #tpu.core_type<tc>, window_params = [{pipeline_mode = #tpu.pipeline_mode<synchronous>, transform_indices = @transform_0, window_bounds = array<i64: 2, 32, 49>}, {pipeline_mode = #tpu.pipeline_mode<synchronous>, transform_indices = @transform_1, window_bounds = array<i64: 16, 32>}, {pipeline_mode = #tpu.pipeline_mode<synchronous>, transform_indices = @transform_2, window_bounds = array<i64: 16, 1>}, {pipeline_mode = #tpu.pipeline_mode<synchronous>, transform_indices = @transform_3, window_bounds = array<i64: 50, 16>}, {pipeline_mode = #tpu.pipeline_mode<synchronous>, transform_indices = @transform_4, window_bounds = array<i64: 40, 16>}, {pipeline_mode = #tpu.pipeline_mode<synchronous>, transform_indices = @transform_5, window_bounds = array<i64: 16, 50>}, {pipeline_mode = #tpu.pipeline_mode<synchronous>, transform_indices = @transform_6, window_bounds = array<i64: 1, 50>}, {pipeline_mode = #tpu.pipeline_mode<synchronous>, transform_indices = @transform_7, window_bounds = array<i64: 2, 8, 50>}, {pipeline_mode = #tpu.pipeline_mode<synchronous>, transform_indices = @transform_8, window_bounds = array<i64: 2, 8, 49>}]} {
    %cst = arith.constant 0.000000e+00 : f32
    %0 = vector.broadcast %cst : f32 to vector<1x16xf32>
    %c0 = arith.constant 0 : index
    %c0_0 = arith.constant 0 : index
    %1 = vector.load %arg14[%c0, %c0_0] : memref<1x16xf32, #tpu.memory_space<vmem>>, vector<1x16xf32>
    tpu.vector_store %arg14[%c0, %c0_0], %0 {strides = array<i32>} : memref<1x16xf32, #tpu.memory_space<vmem>>, vector<1x16xf32>,
    %cst_1 = arith.constant 0.000000e+00 : f32
    %2 = vector.broadcast %cst_1 : f32 to vector<1x1xf32>
    %c0_2 = arith.constant 0 : index
    %c0_3 = arith.constant 0 : index
    %3 = vector.load %arg15[%c0_2, %c0_3] : memref<1x1xf32, #tpu.memory_space<vmem>>, vector<1x1xf32>
    tpu.vector_store %arg15[%c0_2, %c0_3], %2 {strides = array<i32>} : memref<1x1xf32, #tpu.memory_space<vmem>>, vector<1x1xf32>,
    %c0_4 = arith.constant 0 : index
    %4 = memref.load %arg3[%c0_4] : memref<2xi32, #tpu.memory_space<smem>>
    %c0_i32 = arith.constant 0 : i32
    %5 = arith.cmpi sgt, %4, %c0_i32 : i32
    %6 = arith.extui %5 : i1 to i32
    %c0_i32_5 = arith.constant 0 : i32
    %7 = arith.cmpi ne, %6, %c0_i32_5 : i32
    scf.if %7 {
      %c0_152 = arith.constant 0 : index
      %c0_153 = arith.constant 0 : index
      %199 = memref.load %arg2[%c0_152, %c0_153] : memref<2x6xi32, #tpu.memory_space<smem>>
      %c0_154 = arith.constant 0 : index
      %c0_155 = arith.constant 0 : index
      %200 = vector.load %arg14[%c0_154, %c0_155] : memref<1x16xf32, #tpu.memory_space<vmem>>, vector<1x16xf32>
      %201 = arith.index_cast %199 : i32 to index
      %c0_156 = arith.constant 0 : index
      %202 = vector.load %arg8[%201, %c0_156] : memref<40x16xf32, #tpu.memory_space<vmem>>, vector<1x16xf32>
      %203 = arith.addf %200, %202 : vector<1x16xf32>
      %c0_157 = arith.constant 0 : index
      %c0_158 = arith.constant 0 : index
      %204 = vector.load %arg14[%c0_157, %c0_158] : memref<1x16xf32, #tpu.memory_space<vmem>>, vector<1x16xf32>
      tpu.vector_store %arg14[%c0_157, %c0_158], %203 {strides = array<i32>} : memref<1x16xf32, #tpu.memory_space<vmem>>, vector<1x16xf32>,
      %c0_159 = arith.constant 0 : index
      %c0_160 = arith.constant 0 : index
      %205 = vector.load %arg15[%c0_159, %c0_160] : memref<1x1xf32, #tpu.memory_space<vmem>>, vector<1x1xf32>
      %cst_161 = arith.constant 1.000000e+00 : f32
      %206 = vector.broadcast %cst_161 : f32 to vector<1x1xf32>
      %207 = arith.addf %205, %206 : vector<1x1xf32>
      %c0_162 = arith.constant 0 : index
      %c0_163 = arith.constant 0 : index
      %208 = vector.load %arg15[%c0_162, %c0_163] : memref<1x1xf32, #tpu.memory_space<vmem>>, vector<1x1xf32>
      tpu.vector_store %arg15[%c0_162, %c0_163], %207 {strides = array<i32>} : memref<1x1xf32, #tpu.memory_space<vmem>>, vector<1x1xf32>,
    } else {
    }
    %c1_i32 = arith.constant 1 : i32
    %8 = arith.cmpi sgt, %4, %c1_i32 : i32
    %9 = arith.extui %8 : i1 to i32
    %c0_i32_6 = arith.constant 0 : i32
    %10 = arith.cmpi ne, %9, %c0_i32_6 : i32
    scf.if %10 {
      %c0_152 = arith.constant 0 : index
      %c1_153 = arith.constant 1 : index
      %199 = memref.load %arg2[%c0_152, %c1_153] : memref<2x6xi32, #tpu.memory_space<smem>>
      %c0_154 = arith.constant 0 : index
      %c0_155 = arith.constant 0 : index
      %200 = vector.load %arg14[%c0_154, %c0_155] : memref<1x16xf32, #tpu.memory_space<vmem>>, vector<1x16xf32>
      %201 = arith.index_cast %199 : i32 to index
      %c0_156 = arith.constant 0 : index
      %202 = vector.load %arg8[%201, %c0_156] : memref<40x16xf32, #tpu.memory_space<vmem>>, vector<1x16xf32>
      %203 = arith.addf %200, %202 : vector<1x16xf32>
      %c0_157 = arith.constant 0 : index
      %c0_158 = arith.constant 0 : index
      %204 = vector.load %arg14[%c0_157, %c0_158] : memref<1x16xf32, #tpu.memory_space<vmem>>, vector<1x16xf32>
      tpu.vector_store %arg14[%c0_157, %c0_158], %203 {strides = array<i32>} : memref<1x16xf32, #tpu.memory_space<vmem>>, vector<1x16xf32>,
      %c0_159 = arith.constant 0 : index
      %c0_160 = arith.constant 0 : index
      %205 = vector.load %arg15[%c0_159, %c0_160] : memref<1x1xf32, #tpu.memory_space<vmem>>, vector<1x1xf32>
      %cst_161 = arith.constant 1.000000e+00 : f32
      %206 = vector.broadcast %cst_161 : f32 to vector<1x1xf32>
      %207 = arith.addf %205, %206 : vector<1x1xf32>
      %c0_162 = arith.constant 0 : index
      %c0_163 = arith.constant 0 : index
      %208 = vector.load %arg15[%c0_162, %c0_163] : memref<1x1xf32, #tpu.memory_space<vmem>>, vector<1x1xf32>
      tpu.vector_store %arg15[%c0_162, %c0_163], %207 {strides = array<i32>} : memref<1x1xf32, #tpu.memory_space<vmem>>, vector<1x1xf32>,
    } else {
    }
    %c2_i32 = arith.constant 2 : i32
    %11 = arith.cmpi sgt, %4, %c2_i32 : i32
    %12 = arith.extui %11 : i1 to i32
    %c0_i32_7 = arith.constant 0 : i32
    %13 = arith.cmpi ne, %12, %c0_i32_7 : i32
    scf.if %13 {
      %c0_152 = arith.constant 0 : index
      %c2_153 = arith.constant 2 : index
      %199 = memref.load %arg2[%c0_152, %c2_153] : memref<2x6xi32, #tpu.memory_space<smem>>
      %c0_154 = arith.constant 0 : index
      %c0_155 = arith.constant 0 : index
      %200 = vector.load %arg14[%c0_154, %c0_155] : memref<1x16xf32, #tpu.memory_space<vmem>>, vector<1x16xf32>
      %201 = arith.index_cast %199 : i32 to index
      %c0_156 = arith.constant 0 : index
      %202 = vector.load %arg8[%201, %c0_156] : memref<40x16xf32, #tpu.memory_space<vmem>>, vector<1x16xf32>
      %203 = arith.addf %200, %202 : vector<1x16xf32>
      %c0_157 = arith.constant 0 : index
      %c0_158 = arith.constant 0 : index
      %204 = vector.load %arg14[%c0_157, %c0_158] : memref<1x16xf32, #tpu.memory_space<vmem>>, vector<1x16xf32>
      tpu.vector_store %arg14[%c0_157, %c0_158], %203 {strides = array<i32>} : memref<1x16xf32, #tpu.memory_space<vmem>>, vector<1x16xf32>,
      %c0_159 = arith.constant 0 : index
      %c0_160 = arith.constant 0 : index
      %205 = vector.load %arg15[%c0_159, %c0_160] : memref<1x1xf32, #tpu.memory_space<vmem>>, vector<1x1xf32>
      %cst_161 = arith.constant 1.000000e+00 : f32
      %206 = vector.broadcast %cst_161 : f32 to vector<1x1xf32>
      %207 = arith.addf %205, %206 : vector<1x1xf32>
      %c0_162 = arith.constant 0 : index
      %c0_163 = arith.constant 0 : index
      %208 = vector.load %arg15[%c0_162, %c0_163] : memref<1x1xf32, #tpu.memory_space<vmem>>, vector<1x1xf32>
      tpu.vector_store %arg15[%c0_162, %c0_163], %207 {strides = array<i32>} : memref<1x1xf32, #tpu.memory_space<vmem>>, vector<1x1xf32>,
    } else {
    }
    %c3_i32 = arith.constant 3 : i32
    %14 = arith.cmpi sgt, %4, %c3_i32 : i32
    %15 = arith.extui %14 : i1 to i32
    %c0_i32_8 = arith.constant 0 : i32
    %16 = arith.cmpi ne, %15, %c0_i32_8 : i32
    scf.if %16 {
      %c0_152 = arith.constant 0 : index
      %c3_153 = arith.constant 3 : index
      %199 = memref.load %arg2[%c0_152, %c3_153] : memref<2x6xi32, #tpu.memory_space<smem>>
      %c0_154 = arith.constant 0 : index
      %c0_155 = arith.constant 0 : index
      %200 = vector.load %arg14[%c0_154, %c0_155] : memref<1x16xf32, #tpu.memory_space<vmem>>, vector<1x16xf32>
      %201 = arith.index_cast %199 : i32 to index
      %c0_156 = arith.constant 0 : index
      %202 = vector.load %arg8[%201, %c0_156] : memref<40x16xf32, #tpu.memory_space<vmem>>, vector<1x16xf32>
      %203 = arith.addf %200, %202 : vector<1x16xf32>
      %c0_157 = arith.constant 0 : index
      %c0_158 = arith.constant 0 : index
      %204 = vector.load %arg14[%c0_157, %c0_158] : memref<1x16xf32, #tpu.memory_space<vmem>>, vector<1x16xf32>
      tpu.vector_store %arg14[%c0_157, %c0_158], %203 {strides = array<i32>} : memref<1x16xf32, #tpu.memory_space<vmem>>, vector<1x16xf32>,
      %c0_159 = arith.constant 0 : index
      %c0_160 = arith.constant 0 : index
      %205 = vector.load %arg15[%c0_159, %c0_160] : memref<1x1xf32, #tpu.memory_space<vmem>>, vector<1x1xf32>
      %cst_161 = arith.constant 1.000000e+00 : f32
      %206 = vector.broadcast %cst_161 : f32 to vector<1x1xf32>
      %207 = arith.addf %205, %206 : vector<1x1xf32>
      %c0_162 = arith.constant 0 : index
      %c0_163 = arith.constant 0 : index
      %208 = vector.load %arg15[%c0_162, %c0_163] : memref<1x1xf32, #tpu.memory_space<vmem>>, vector<1x1xf32>
      tpu.vector_store %arg15[%c0_162, %c0_163], %207 {strides = array<i32>} : memref<1x1xf32, #tpu.memory_space<vmem>>, vector<1x1xf32>,
    } else {
    }
    %c4_i32 = arith.constant 4 : i32
    %17 = arith.cmpi sgt, %4, %c4_i32 : i32
    %18 = arith.extui %17 : i1 to i32
    %c0_i32_9 = arith.constant 0 : i32
    %19 = arith.cmpi ne, %18, %c0_i32_9 : i32
    scf.if %19 {
      %c0_152 = arith.constant 0 : index
      %c4_153 = arith.constant 4 : index
      %199 = memref.load %arg2[%c0_152, %c4_153] : memref<2x6xi32, #tpu.memory_space<smem>>
      %c0_154 = arith.constant 0 : index
      %c0_155 = arith.constant 0 : index
      %200 = vector.load %arg14[%c0_154, %c0_155] : memref<1x16xf32, #tpu.memory_space<vmem>>, vector<1x16xf32>
      %201 = arith.index_cast %199 : i32 to index
      %c0_156 = arith.constant 0 : index
      %202 = vector.load %arg8[%201, %c0_156] : memref<40x16xf32, #tpu.memory_space<vmem>>, vector<1x16xf32>
      %203 = arith.addf %200, %202 : vector<1x16xf32>
      %c0_157 = arith.constant 0 : index
      %c0_158 = arith.constant 0 : index
      %204 = vector.load %arg14[%c0_157, %c0_158] : memref<1x16xf32, #tpu.memory_space<vmem>>, vector<1x16xf32>
      tpu.vector_store %arg14[%c0_157, %c0_158], %203 {strides = array<i32>} : memref<1x16xf32, #tpu.memory_space<vmem>>, vector<1x16xf32>,
      %c0_159 = arith.constant 0 : index
      %c0_160 = arith.constant 0 : index
      %205 = vector.load %arg15[%c0_159, %c0_160] : memref<1x1xf32, #tpu.memory_space<vmem>>, vector<1x1xf32>
      %cst_161 = arith.constant 1.000000e+00 : f32
      %206 = vector.broadcast %cst_161 : f32 to vector<1x1xf32>
      %207 = arith.addf %205, %206 : vector<1x1xf32>
      %c0_162 = arith.constant 0 : index
      %c0_163 = arith.constant 0 : index
      %208 = vector.load %arg15[%c0_162, %c0_163] : memref<1x1xf32, #tpu.memory_space<vmem>>, vector<1x1xf32>
      tpu.vector_store %arg15[%c0_162, %c0_163], %207 {strides = array<i32>} : memref<1x1xf32, #tpu.memory_space<vmem>>, vector<1x1xf32>,
    } else {
    }
    %c5_i32 = arith.constant 5 : i32
    %20 = arith.cmpi sgt, %4, %c5_i32 : i32
    %21 = arith.extui %20 : i1 to i32
    %c0_i32_10 = arith.constant 0 : i32
    %22 = arith.cmpi ne, %21, %c0_i32_10 : i32
    scf.if %22 {
      %c0_152 = arith.constant 0 : index
      %c5_153 = arith.constant 5 : index
      %199 = memref.load %arg2[%c0_152, %c5_153] : memref<2x6xi32, #tpu.memory_space<smem>>
      %c0_154 = arith.constant 0 : index
      %c0_155 = arith.constant 0 : index
      %200 = vector.load %arg14[%c0_154, %c0_155] : memref<1x16xf32, #tpu.memory_space<vmem>>, vector<1x16xf32>
      %201 = arith.index_cast %199 : i32 to index
      %c0_156 = arith.constant 0 : index
      %202 = vector.load %arg8[%201, %c0_156] : memref<40x16xf32, #tpu.memory_space<vmem>>, vector<1x16xf32>
      %203 = arith.addf %200, %202 : vector<1x16xf32>
      %c0_157 = arith.constant 0 : index
      %c0_158 = arith.constant 0 : index
      %204 = vector.load %arg14[%c0_157, %c0_158] : memref<1x16xf32, #tpu.memory_space<vmem>>, vector<1x16xf32>
      tpu.vector_store %arg14[%c0_157, %c0_158], %203 {strides = array<i32>} : memref<1x16xf32, #tpu.memory_space<vmem>>, vector<1x16xf32>,
      %c0_159 = arith.constant 0 : index
      %c0_160 = arith.constant 0 : index
      %205 = vector.load %arg15[%c0_159, %c0_160] : memref<1x1xf32, #tpu.memory_space<vmem>>, vector<1x1xf32>
      %cst_161 = arith.constant 1.000000e+00 : f32
      %206 = vector.broadcast %cst_161 : f32 to vector<1x1xf32>
      %207 = arith.addf %205, %206 : vector<1x1xf32>
      %c0_162 = arith.constant 0 : index
      %c0_163 = arith.constant 0 : index
      %208 = vector.load %arg15[%c0_162, %c0_163] : memref<1x1xf32, #tpu.memory_space<vmem>>, vector<1x1xf32>
      tpu.vector_store %arg15[%c0_162, %c0_163], %207 {strides = array<i32>} : memref<1x1xf32, #tpu.memory_space<vmem>>, vector<1x1xf32>,
    } else {
    }
    %c0_11 = arith.constant 0 : index
    %c0_12 = arith.constant 0 : index
    %23 = vector.load %arg14[%c0_11, %c0_12] : memref<1x16xf32, #tpu.memory_space<vmem>>, vector<1x16xf32>
    %c0_13 = arith.constant 0 : index
    %c0_14 = arith.constant 0 : index
    %24 = vector.load %arg15[%c0_13, %c0_14] : memref<1x1xf32, #tpu.memory_space<vmem>>, vector<1x1xf32>
    %cst_15 = arith.constant 1.000000e+00 : f32
    %25 = vector.broadcast %cst_15 : f32 to vector<1x1xf32>
    %26 = arith.maximumf %24, %25 : vector<1x1xf32>
    %27 = vector.broadcast %26 : vector<1x1xf32> to vector<1x16xf32>
    %28 = arith.divf %23, %27 : vector<1x16xf32>
    %c0_16 = arith.constant 0 : index
    %c0_17 = arith.constant 0 : index
    %29 = memref.load %arg1[%c0_16, %c0_17] : memref<2x8xi32, #tpu.memory_space<smem>>
    %30 = arith.index_cast %29 : i32 to index
    %c0_18 = arith.constant 0 : index
    %31 = vector.load %arg7[%30, %c0_18] : memref<50x16xf32, #tpu.memory_space<vmem>>, vector<1x16xf32>
    %32 = arith.addf %31, %28 : vector<1x16xf32>
    %c0_19 = arith.constant 0 : index
    %c0_20 = arith.constant 0 : index
    %33 = vector.load %arg13[%c0_19, %c0_20] : memref<16x16xf32, #tpu.memory_space<vmem>>, vector<1x16xf32>
    tpu.vector_store %arg13[%c0_19, %c0_20], %32 {strides = array<i32>} : memref<16x16xf32, #tpu.memory_space<vmem>>, vector<1x16xf32>,
    %c0_21 = arith.constant 0 : index
    %c1 = arith.constant 1 : index
    %34 = memref.load %arg1[%c0_21, %c1] : memref<2x8xi32, #tpu.memory_space<smem>>
    %35 = arith.index_cast %34 : i32 to index
    %c0_22 = arith.constant 0 : index
    %36 = vector.load %arg7[%35, %c0_22] : memref<50x16xf32, #tpu.memory_space<vmem>>, vector<1x16xf32>
    %37 = arith.addf %36, %28 : vector<1x16xf32>
    %c1_23 = arith.constant 1 : index
    %c0_24 = arith.constant 0 : index
    %38 = vector.load %arg13[%c1_23, %c0_24] : memref<16x16xf32, #tpu.memory_space<vmem>>, vector<1x16xf32>
    tpu.vector_store %arg13[%c1_23, %c0_24], %37 {strides = array<i32>} : memref<16x16xf32, #tpu.memory_space<vmem>>, vector<1x16xf32>,
    %c0_25 = arith.constant 0 : index
    %c2 = arith.constant 2 : index
    %39 = memref.load %arg1[%c0_25, %c2] : memref<2x8xi32, #tpu.memory_space<smem>>
    %40 = arith.index_cast %39 : i32 to index
    %c0_26 = arith.constant 0 : index
    %41 = vector.load %arg7[%40, %c0_26] : memref<50x16xf32, #tpu.memory_space<vmem>>, vector<1x16xf32>
    %42 = arith.addf %41, %28 : vector<1x16xf32>
    %c2_27 = arith.constant 2 : index
    %c0_28 = arith.constant 0 : index
    %43 = vector.load %arg13[%c2_27, %c0_28] : memref<16x16xf32, #tpu.memory_space<vmem>>, vector<1x16xf32>
    tpu.vector_store %arg13[%c2_27, %c0_28], %42 {strides = array<i32>} : memref<16x16xf32, #tpu.memory_space<vmem>>, vector<1x16xf32>,
    %c0_29 = arith.constant 0 : index
    %c3 = arith.constant 3 : index
    %44 = memref.load %arg1[%c0_29, %c3] : memref<2x8xi32, #tpu.memory_space<smem>>
    %45 = arith.index_cast %44 : i32 to index
    %c0_30 = arith.constant 0 : index
    %46 = vector.load %arg7[%45, %c0_30] : memref<50x16xf32, #tpu.memory_space<vmem>>, vector<1x16xf32>
    %47 = arith.addf %46, %28 : vector<1x16xf32>
    %c3_31 = arith.constant 3 : index
    %c0_32 = arith.constant 0 : index
    %48 = vector.load %arg13[%c3_31, %c0_32] : memref<16x16xf32, #tpu.memory_space<vmem>>, vector<1x16xf32>
    tpu.vector_store %arg13[%c3_31, %c0_32], %47 {strides = array<i32>} : memref<16x16xf32, #tpu.memory_space<vmem>>, vector<1x16xf32>,
    %c0_33 = arith.constant 0 : index
    %c4 = arith.constant 4 : index
    %49 = memref.load %arg1[%c0_33, %c4] : memref<2x8xi32, #tpu.memory_space<smem>>
    %50 = arith.index_cast %49 : i32 to index
    %c0_34 = arith.constant 0 : index
    %51 = vector.load %arg7[%50, %c0_34] : memref<50x16xf32, #tpu.memory_space<vmem>>, vector<1x16xf32>
    %52 = arith.addf %51, %28 : vector<1x16xf32>
    %c4_35 = arith.constant 4 : index
    %c0_36 = arith.constant 0 : index
    %53 = vector.load %arg13[%c4_35, %c0_36] : memref<16x16xf32, #tpu.memory_space<vmem>>, vector<1x16xf32>
    tpu.vector_store %arg13[%c4_35, %c0_36], %52 {strides = array<i32>} : memref<16x16xf32, #tpu.memory_space<vmem>>, vector<1x16xf32>,
    %c0_37 = arith.constant 0 : index
    %c5 = arith.constant 5 : index
    %54 = memref.load %arg1[%c0_37, %c5] : memref<2x8xi32, #tpu.memory_space<smem>>
    %55 = arith.index_cast %54 : i32 to index
    %c0_38 = arith.constant 0 : index
    %56 = vector.load %arg7[%55, %c0_38] : memref<50x16xf32, #tpu.memory_space<vmem>>, vector<1x16xf32>
    %57 = arith.addf %56, %28 : vector<1x16xf32>
    %c5_39 = arith.constant 5 : index
    %c0_40 = arith.constant 0 : index
    %58 = vector.load %arg13[%c5_39, %c0_40] : memref<16x16xf32, #tpu.memory_space<vmem>>, vector<1x16xf32>
    tpu.vector_store %arg13[%c5_39, %c0_40], %57 {strides = array<i32>} : memref<16x16xf32, #tpu.memory_space<vmem>>, vector<1x16xf32>,
    %c0_41 = arith.constant 0 : index
    %c6 = arith.constant 6 : index
    %59 = memref.load %arg1[%c0_41, %c6] : memref<2x8xi32, #tpu.memory_space<smem>>
    %60 = arith.index_cast %59 : i32 to index
    %c0_42 = arith.constant 0 : index
    %61 = vector.load %arg7[%60, %c0_42] : memref<50x16xf32, #tpu.memory_space<vmem>>, vector<1x16xf32>
    %62 = arith.addf %61, %28 : vector<1x16xf32>
    %c6_43 = arith.constant 6 : index
    %c0_44 = arith.constant 0 : index
    %63 = vector.load %arg13[%c6_43, %c0_44] : memref<16x16xf32, #tpu.memory_space<vmem>>, vector<1x16xf32>
    tpu.vector_store %arg13[%c6_43, %c0_44], %62 {strides = array<i32>} : memref<16x16xf32, #tpu.memory_space<vmem>>, vector<1x16xf32>,
    %c0_45 = arith.constant 0 : index
    %c7 = arith.constant 7 : index
    %64 = memref.load %arg1[%c0_45, %c7] : memref<2x8xi32, #tpu.memory_space<smem>>
    %65 = arith.index_cast %64 : i32 to index
    %c0_46 = arith.constant 0 : index
    %66 = vector.load %arg7[%65, %c0_46] : memref<50x16xf32, #tpu.memory_space<vmem>>, vector<1x16xf32>
    %67 = arith.addf %66, %28 : vector<1x16xf32>
    %c7_47 = arith.constant 7 : index
    %c0_48 = arith.constant 0 : index
    %68 = vector.load %arg13[%c7_47, %c0_48] : memref<16x16xf32, #tpu.memory_space<vmem>>, vector<1x16xf32>
    tpu.vector_store %arg13[%c7_47, %c0_48], %67 {strides = array<i32>} : memref<16x16xf32, #tpu.memory_space<vmem>>, vector<1x16xf32>,
    %cst_49 = arith.constant 0.000000e+00 : f32
    %69 = vector.broadcast %cst_49 : f32 to vector<1x16xf32>
    %c0_50 = arith.constant 0 : index
    %c0_51 = arith.constant 0 : index
    %70 = vector.load %arg14[%c0_50, %c0_51] : memref<1x16xf32, #tpu.memory_space<vmem>>, vector<1x16xf32>
    tpu.vector_store %arg14[%c0_50, %c0_51], %69 {strides = array<i32>} : memref<1x16xf32, #tpu.memory_space<vmem>>, vector<1x16xf32>,
    %cst_52 = arith.constant 0.000000e+00 : f32
    %71 = vector.broadcast %cst_52 : f32 to vector<1x1xf32>
    %c0_53 = arith.constant 0 : index
    %c0_54 = arith.constant 0 : index
    %72 = vector.load %arg15[%c0_53, %c0_54] : memref<1x1xf32, #tpu.memory_space<vmem>>, vector<1x1xf32>
    tpu.vector_store %arg15[%c0_53, %c0_54], %71 {strides = array<i32>} : memref<1x1xf32, #tpu.memory_space<vmem>>, vector<1x1xf32>,
    %c1_55 = arith.constant 1 : index
    %73 = memref.load %arg3[%c1_55] : memref<2xi32, #tpu.memory_space<smem>>
    %c0_i32_56 = arith.constant 0 : i32
    %74 = arith.cmpi sgt, %73, %c0_i32_56 : i32
    %75 = arith.extui %74 : i1 to i32
    %c0_i32_57 = arith.constant 0 : i32
    %76 = arith.cmpi ne, %75, %c0_i32_57 : i32
    scf.if %76 {
      %c1_152 = arith.constant 1 : index
      %c0_153 = arith.constant 0 : index
      %199 = memref.load %arg2[%c1_152, %c0_153] : memref<2x6xi32, #tpu.memory_space<smem>>
      %c0_154 = arith.constant 0 : index
      %c0_155 = arith.constant 0 : index
      %200 = vector.load %arg14[%c0_154, %c0_155] : memref<1x16xf32, #tpu.memory_space<vmem>>, vector<1x16xf32>
      %201 = arith.index_cast %199 : i32 to index
      %c0_156 = arith.constant 0 : index
      %202 = vector.load %arg8[%201, %c0_156] : memref<40x16xf32, #tpu.memory_space<vmem>>, vector<1x16xf32>
      %203 = arith.addf %200, %202 : vector<1x16xf32>
      %c0_157 = arith.constant 0 : index
      %c0_158 = arith.constant 0 : index
      %204 = vector.load %arg14[%c0_157, %c0_158] : memref<1x16xf32, #tpu.memory_space<vmem>>, vector<1x16xf32>
      tpu.vector_store %arg14[%c0_157, %c0_158], %203 {strides = array<i32>} : memref<1x16xf32, #tpu.memory_space<vmem>>, vector<1x16xf32>,
      %c0_159 = arith.constant 0 : index
      %c0_160 = arith.constant 0 : index
      %205 = vector.load %arg15[%c0_159, %c0_160] : memref<1x1xf32, #tpu.memory_space<vmem>>, vector<1x1xf32>
      %cst_161 = arith.constant 1.000000e+00 : f32
      %206 = vector.broadcast %cst_161 : f32 to vector<1x1xf32>
      %207 = arith.addf %205, %206 : vector<1x1xf32>
      %c0_162 = arith.constant 0 : index
      %c0_163 = arith.constant 0 : index
      %208 = vector.load %arg15[%c0_162, %c0_163] : memref<1x1xf32, #tpu.memory_space<vmem>>, vector<1x1xf32>
      tpu.vector_store %arg15[%c0_162, %c0_163], %207 {strides = array<i32>} : memref<1x1xf32, #tpu.memory_space<vmem>>, vector<1x1xf32>,
    } else {
    }
    %c1_i32_58 = arith.constant 1 : i32
    %77 = arith.cmpi sgt, %73, %c1_i32_58 : i32
    %78 = arith.extui %77 : i1 to i32
    %c0_i32_59 = arith.constant 0 : i32
    %79 = arith.cmpi ne, %78, %c0_i32_59 : i32
    scf.if %79 {
      %c1_152 = arith.constant 1 : index
      %c1_153 = arith.constant 1 : index
      %199 = memref.load %arg2[%c1_152, %c1_153] : memref<2x6xi32, #tpu.memory_space<smem>>
      %c0_154 = arith.constant 0 : index
      %c0_155 = arith.constant 0 : index
      %200 = vector.load %arg14[%c0_154, %c0_155] : memref<1x16xf32, #tpu.memory_space<vmem>>, vector<1x16xf32>
      %201 = arith.index_cast %199 : i32 to index
      %c0_156 = arith.constant 0 : index
      %202 = vector.load %arg8[%201, %c0_156] : memref<40x16xf32, #tpu.memory_space<vmem>>, vector<1x16xf32>
      %203 = arith.addf %200, %202 : vector<1x16xf32>
      %c0_157 = arith.constant 0 : index
      %c0_158 = arith.constant 0 : index
      %204 = vector.load %arg14[%c0_157, %c0_158] : memref<1x16xf32, #tpu.memory_space<vmem>>, vector<1x16xf32>
      tpu.vector_store %arg14[%c0_157, %c0_158], %203 {strides = array<i32>} : memref<1x16xf32, #tpu.memory_space<vmem>>, vector<1x16xf32>,
      %c0_159 = arith.constant 0 : index
      %c0_160 = arith.constant 0 : index
      %205 = vector.load %arg15[%c0_159, %c0_160] : memref<1x1xf32, #tpu.memory_space<vmem>>, vector<1x1xf32>
      %cst_161 = arith.constant 1.000000e+00 : f32
      %206 = vector.broadcast %cst_161 : f32 to vector<1x1xf32>
      %207 = arith.addf %205, %206 : vector<1x1xf32>
      %c0_162 = arith.constant 0 : index
      %c0_163 = arith.constant 0 : index
      %208 = vector.load %arg15[%c0_162, %c0_163] : memref<1x1xf32, #tpu.memory_space<vmem>>, vector<1x1xf32>
      tpu.vector_store %arg15[%c0_162, %c0_163], %207 {strides = array<i32>} : memref<1x1xf32, #tpu.memory_space<vmem>>, vector<1x1xf32>,
    } else {
    }
    %c2_i32_60 = arith.constant 2 : i32
    %80 = arith.cmpi sgt, %73, %c2_i32_60 : i32
    %81 = arith.extui %80 : i1 to i32
    %c0_i32_61 = arith.constant 0 : i32
    %82 = arith.cmpi ne, %81, %c0_i32_61 : i32
    scf.if %82 {
      %c1_152 = arith.constant 1 : index
      %c2_153 = arith.constant 2 : index
      %199 = memref.load %arg2[%c1_152, %c2_153] : memref<2x6xi32, #tpu.memory_space<smem>>
      %c0_154 = arith.constant 0 : index
      %c0_155 = arith.constant 0 : index
      %200 = vector.load %arg14[%c0_154, %c0_155] : memref<1x16xf32, #tpu.memory_space<vmem>>, vector<1x16xf32>
      %201 = arith.index_cast %199 : i32 to index
      %c0_156 = arith.constant 0 : index
      %202 = vector.load %arg8[%201, %c0_156] : memref<40x16xf32, #tpu.memory_space<vmem>>, vector<1x16xf32>
      %203 = arith.addf %200, %202 : vector<1x16xf32>
      %c0_157 = arith.constant 0 : index
      %c0_158 = arith.constant 0 : index
      %204 = vector.load %arg14[%c0_157, %c0_158] : memref<1x16xf32, #tpu.memory_space<vmem>>, vector<1x16xf32>
      tpu.vector_store %arg14[%c0_157, %c0_158], %203 {strides = array<i32>} : memref<1x16xf32, #tpu.memory_space<vmem>>, vector<1x16xf32>,
      %c0_159 = arith.constant 0 : index
      %c0_160 = arith.constant 0 : index
      %205 = vector.load %arg15[%c0_159, %c0_160] : memref<1x1xf32, #tpu.memory_space<vmem>>, vector<1x1xf32>
      %cst_161 = arith.constant 1.000000e+00 : f32
      %206 = vector.broadcast %cst_161 : f32 to vector<1x1xf32>
      %207 = arith.addf %205, %206 : vector<1x1xf32>
      %c0_162 = arith.constant 0 : index
      %c0_163 = arith.constant 0 : index
      %208 = vector.load %arg15[%c0_162, %c0_163] : memref<1x1xf32, #tpu.memory_space<vmem>>, vector<1x1xf32>
      tpu.vector_store %arg15[%c0_162, %c0_163], %207 {strides = array<i32>} : memref<1x1xf32, #tpu.memory_space<vmem>>, vector<1x1xf32>,
    } else {
    }
    %c3_i32_62 = arith.constant 3 : i32
    %83 = arith.cmpi sgt, %73, %c3_i32_62 : i32
    %84 = arith.extui %83 : i1 to i32
    %c0_i32_63 = arith.constant 0 : i32
    %85 = arith.cmpi ne, %84, %c0_i32_63 : i32
    scf.if %85 {
      %c1_152 = arith.constant 1 : index
      %c3_153 = arith.constant 3 : index
      %199 = memref.load %arg2[%c1_152, %c3_153] : memref<2x6xi32, #tpu.memory_space<smem>>
      %c0_154 = arith.constant 0 : index
      %c0_155 = arith.constant 0 : index
      %200 = vector.load %arg14[%c0_154, %c0_155] : memref<1x16xf32, #tpu.memory_space<vmem>>, vector<1x16xf32>
      %201 = arith.index_cast %199 : i32 to index
      %c0_156 = arith.constant 0 : index
      %202 = vector.load %arg8[%201, %c0_156] : memref<40x16xf32, #tpu.memory_space<vmem>>, vector<1x16xf32>
      %203 = arith.addf %200, %202 : vector<1x16xf32>
      %c0_157 = arith.constant 0 : index
      %c0_158 = arith.constant 0 : index
      %204 = vector.load %arg14[%c0_157, %c0_158] : memref<1x16xf32, #tpu.memory_space<vmem>>, vector<1x16xf32>
      tpu.vector_store %arg14[%c0_157, %c0_158], %203 {strides = array<i32>} : memref<1x16xf32, #tpu.memory_space<vmem>>, vector<1x16xf32>,
      %c0_159 = arith.constant 0 : index
      %c0_160 = arith.constant 0 : index
      %205 = vector.load %arg15[%c0_159, %c0_160] : memref<1x1xf32, #tpu.memory_space<vmem>>, vector<1x1xf32>
      %cst_161 = arith.constant 1.000000e+00 : f32
      %206 = vector.broadcast %cst_161 : f32 to vector<1x1xf32>
      %207 = arith.addf %205, %206 : vector<1x1xf32>
      %c0_162 = arith.constant 0 : index
      %c0_163 = arith.constant 0 : index
      %208 = vector.load %arg15[%c0_162, %c0_163] : memref<1x1xf32, #tpu.memory_space<vmem>>, vector<1x1xf32>
      tpu.vector_store %arg15[%c0_162, %c0_163], %207 {strides = array<i32>} : memref<1x1xf32, #tpu.memory_space<vmem>>, vector<1x1xf32>,
    } else {
    }
    %c4_i32_64 = arith.constant 4 : i32
    %86 = arith.cmpi sgt, %73, %c4_i32_64 : i32
    %87 = arith.extui %86 : i1 to i32
    %c0_i32_65 = arith.constant 0 : i32
    %88 = arith.cmpi ne, %87, %c0_i32_65 : i32
    scf.if %88 {
      %c1_152 = arith.constant 1 : index
      %c4_153 = arith.constant 4 : index
      %199 = memref.load %arg2[%c1_152, %c4_153] : memref<2x6xi32, #tpu.memory_space<smem>>
      %c0_154 = arith.constant 0 : index
      %c0_155 = arith.constant 0 : index
      %200 = vector.load %arg14[%c0_154, %c0_155] : memref<1x16xf32, #tpu.memory_space<vmem>>, vector<1x16xf32>
      %201 = arith.index_cast %199 : i32 to index
      %c0_156 = arith.constant 0 : index
      %202 = vector.load %arg8[%201, %c0_156] : memref<40x16xf32, #tpu.memory_space<vmem>>, vector<1x16xf32>
      %203 = arith.addf %200, %202 : vector<1x16xf32>
      %c0_157 = arith.constant 0 : index
      %c0_158 = arith.constant 0 : index
      %204 = vector.load %arg14[%c0_157, %c0_158] : memref<1x16xf32, #tpu.memory_space<vmem>>, vector<1x16xf32>
      tpu.vector_store %arg14[%c0_157, %c0_158], %203 {strides = array<i32>} : memref<1x16xf32, #tpu.memory_space<vmem>>, vector<1x16xf32>,
      %c0_159 = arith.constant 0 : index
      %c0_160 = arith.constant 0 : index
      %205 = vector.load %arg15[%c0_159, %c0_160] : memref<1x1xf32, #tpu.memory_space<vmem>>, vector<1x1xf32>
      %cst_161 = arith.constant 1.000000e+00 : f32
      %206 = vector.broadcast %cst_161 : f32 to vector<1x1xf32>
      %207 = arith.addf %205, %206 : vector<1x1xf32>
      %c0_162 = arith.constant 0 : index
      %c0_163 = arith.constant 0 : index
      %208 = vector.load %arg15[%c0_162, %c0_163] : memref<1x1xf32, #tpu.memory_space<vmem>>, vector<1x1xf32>
      tpu.vector_store %arg15[%c0_162, %c0_163], %207 {strides = array<i32>} : memref<1x1xf32, #tpu.memory_space<vmem>>, vector<1x1xf32>,
    } else {
    }
    %c5_i32_66 = arith.constant 5 : i32
    %89 = arith.cmpi sgt, %73, %c5_i32_66 : i32
    %90 = arith.extui %89 : i1 to i32
    %c0_i32_67 = arith.constant 0 : i32
    %91 = arith.cmpi ne, %90, %c0_i32_67 : i32
    scf.if %91 {
      %c1_152 = arith.constant 1 : index
      %c5_153 = arith.constant 5 : index
      %199 = memref.load %arg2[%c1_152, %c5_153] : memref<2x6xi32, #tpu.memory_space<smem>>
      %c0_154 = arith.constant 0 : index
      %c0_155 = arith.constant 0 : index
      %200 = vector.load %arg14[%c0_154, %c0_155] : memref<1x16xf32, #tpu.memory_space<vmem>>, vector<1x16xf32>
      %201 = arith.index_cast %199 : i32 to index
      %c0_156 = arith.constant 0 : index
      %202 = vector.load %arg8[%201, %c0_156] : memref<40x16xf32, #tpu.memory_space<vmem>>, vector<1x16xf32>
      %203 = arith.addf %200, %202 : vector<1x16xf32>
      %c0_157 = arith.constant 0 : index
      %c0_158 = arith.constant 0 : index
      %204 = vector.load %arg14[%c0_157, %c0_158] : memref<1x16xf32, #tpu.memory_space<vmem>>, vector<1x16xf32>
      tpu.vector_store %arg14[%c0_157, %c0_158], %203 {strides = array<i32>} : memref<1x16xf32, #tpu.memory_space<vmem>>, vector<1x16xf32>,
      %c0_159 = arith.constant 0 : index
      %c0_160 = arith.constant 0 : index
      %205 = vector.load %arg15[%c0_159, %c0_160] : memref<1x1xf32, #tpu.memory_space<vmem>>, vector<1x1xf32>
      %cst_161 = arith.constant 1.000000e+00 : f32
      %206 = vector.broadcast %cst_161 : f32 to vector<1x1xf32>
      %207 = arith.addf %205, %206 : vector<1x1xf32>
      %c0_162 = arith.constant 0 : index
      %c0_163 = arith.constant 0 : index
      %208 = vector.load %arg15[%c0_162, %c0_163] : memref<1x1xf32, #tpu.memory_space<vmem>>, vector<1x1xf32>
      tpu.vector_store %arg15[%c0_162, %c0_163], %207 {strides = array<i32>} : memref<1x1xf32, #tpu.memory_space<vmem>>, vector<1x1xf32>,
    } else {
    }
    %c0_68 = arith.constant 0 : index
    %c0_69 = arith.constant 0 : index
    %92 = vector.load %arg14[%c0_68, %c0_69] : memref<1x16xf32, #tpu.memory_space<vmem>>, vector<1x16xf32>
    %c0_70 = arith.constant 0 : index
    %c0_71 = arith.constant 0 : index
    %93 = vector.load %arg15[%c0_70, %c0_71] : memref<1x1xf32, #tpu.memory_space<vmem>>, vector<1x1xf32>
    %cst_72 = arith.constant 1.000000e+00 : f32
    %94 = vector.broadcast %cst_72 : f32 to vector<1x1xf32>
    %95 = arith.maximumf %93, %94 : vector<1x1xf32>
    %96 = vector.broadcast %95 : vector<1x1xf32> to vector<1x16xf32>
    %97 = arith.divf %92, %96 : vector<1x16xf32>
    %c1_73 = arith.constant 1 : index
    %c0_74 = arith.constant 0 : index
    %98 = memref.load %arg1[%c1_73, %c0_74] : memref<2x8xi32, #tpu.memory_space<smem>>
    %99 = arith.index_cast %98 : i32 to index
    %c0_75 = arith.constant 0 : index
    %100 = vector.load %arg7[%99, %c0_75] : memref<50x16xf32, #tpu.memory_space<vmem>>, vector<1x16xf32>
    %101 = arith.addf %100, %97 : vector<1x16xf32>
    %c8 = arith.constant 8 : index
    %c0_76 = arith.constant 0 : index
    %102 = vector.load %arg13[%c8, %c0_76] : memref<16x16xf32, #tpu.memory_space<vmem>>, vector<1x16xf32>
    tpu.vector_store %arg13[%c8, %c0_76], %101 {strides = array<i32>} : memref<16x16xf32, #tpu.memory_space<vmem>>, vector<1x16xf32>,
    %c1_77 = arith.constant 1 : index
    %c1_78 = arith.constant 1 : index
    %103 = memref.load %arg1[%c1_77, %c1_78] : memref<2x8xi32, #tpu.memory_space<smem>>
    %104 = arith.index_cast %103 : i32 to index
    %c0_79 = arith.constant 0 : index
    %105 = vector.load %arg7[%104, %c0_79] : memref<50x16xf32, #tpu.memory_space<vmem>>, vector<1x16xf32>
    %106 = arith.addf %105, %97 : vector<1x16xf32>
    %c9 = arith.constant 9 : index
    %c0_80 = arith.constant 0 : index
    %107 = vector.load %arg13[%c9, %c0_80] : memref<16x16xf32, #tpu.memory_space<vmem>>, vector<1x16xf32>
    tpu.vector_store %arg13[%c9, %c0_80], %106 {strides = array<i32>} : memref<16x16xf32, #tpu.memory_space<vmem>>, vector<1x16xf32>,
    %c1_81 = arith.constant 1 : index
    %c2_82 = arith.constant 2 : index
    %108 = memref.load %arg1[%c1_81, %c2_82] : memref<2x8xi32, #tpu.memory_space<smem>>
    %109 = arith.index_cast %108 : i32 to index
    %c0_83 = arith.constant 0 : index
    %110 = vector.load %arg7[%109, %c0_83] : memref<50x16xf32, #tpu.memory_space<vmem>>, vector<1x16xf32>
    %111 = arith.addf %110, %97 : vector<1x16xf32>
    %c10 = arith.constant 10 : index
    %c0_84 = arith.constant 0 : index
    %112 = vector.load %arg13[%c10, %c0_84] : memref<16x16xf32, #tpu.memory_space<vmem>>, vector<1x16xf32>
    tpu.vector_store %arg13[%c10, %c0_84], %111 {strides = array<i32>} : memref<16x16xf32, #tpu.memory_space<vmem>>, vector<1x16xf32>,
    %c1_85 = arith.constant 1 : index
    %c3_86 = arith.constant 3 : index
    %113 = memref.load %arg1[%c1_85, %c3_86] : memref<2x8xi32, #tpu.memory_space<smem>>
    %114 = arith.index_cast %113 : i32 to index
    %c0_87 = arith.constant 0 : index
    %115 = vector.load %arg7[%114, %c0_87] : memref<50x16xf32, #tpu.memory_space<vmem>>, vector<1x16xf32>
    %116 = arith.addf %115, %97 : vector<1x16xf32>
    %c11 = arith.constant 11 : index
    %c0_88 = arith.constant 0 : index
    %117 = vector.load %arg13[%c11, %c0_88] : memref<16x16xf32, #tpu.memory_space<vmem>>, vector<1x16xf32>
    tpu.vector_store %arg13[%c11, %c0_88], %116 {strides = array<i32>} : memref<16x16xf32, #tpu.memory_space<vmem>>, vector<1x16xf32>,
    %c1_89 = arith.constant 1 : index
    %c4_90 = arith.constant 4 : index
    %118 = memref.load %arg1[%c1_89, %c4_90] : memref<2x8xi32, #tpu.memory_space<smem>>
    %119 = arith.index_cast %118 : i32 to index
    %c0_91 = arith.constant 0 : index
    %120 = vector.load %arg7[%119, %c0_91] : memref<50x16xf32, #tpu.memory_space<vmem>>, vector<1x16xf32>
    %121 = arith.addf %120, %97 : vector<1x16xf32>
    %c12 = arith.constant 12 : index
    %c0_92 = arith.constant 0 : index
    %122 = vector.load %arg13[%c12, %c0_92] : memref<16x16xf32, #tpu.memory_space<vmem>>, vector<1x16xf32>
    tpu.vector_store %arg13[%c12, %c0_92], %121 {strides = array<i32>} : memref<16x16xf32, #tpu.memory_space<vmem>>, vector<1x16xf32>,
    %c1_93 = arith.constant 1 : index
    %c5_94 = arith.constant 5 : index
    %123 = memref.load %arg1[%c1_93, %c5_94] : memref<2x8xi32, #tpu.memory_space<smem>>
    %124 = arith.index_cast %123 : i32 to index
    %c0_95 = arith.constant 0 : index
    %125 = vector.load %arg7[%124, %c0_95] : memref<50x16xf32, #tpu.memory_space<vmem>>, vector<1x16xf32>
    %126 = arith.addf %125, %97 : vector<1x16xf32>
    %c13 = arith.constant 13 : index
    %c0_96 = arith.constant 0 : index
    %127 = vector.load %arg13[%c13, %c0_96] : memref<16x16xf32, #tpu.memory_space<vmem>>, vector<1x16xf32>
    tpu.vector_store %arg13[%c13, %c0_96], %126 {strides = array<i32>} : memref<16x16xf32, #tpu.memory_space<vmem>>, vector<1x16xf32>,
    %c1_97 = arith.constant 1 : index
    %c6_98 = arith.constant 6 : index
    %128 = memref.load %arg1[%c1_97, %c6_98] : memref<2x8xi32, #tpu.memory_space<smem>>
    %129 = arith.index_cast %128 : i32 to index
    %c0_99 = arith.constant 0 : index
    %130 = vector.load %arg7[%129, %c0_99] : memref<50x16xf32, #tpu.memory_space<vmem>>, vector<1x16xf32>
    %131 = arith.addf %130, %97 : vector<1x16xf32>
    %c14 = arith.constant 14 : index
    %c0_100 = arith.constant 0 : index
    %132 = vector.load %arg13[%c14, %c0_100] : memref<16x16xf32, #tpu.memory_space<vmem>>, vector<1x16xf32>
    tpu.vector_store %arg13[%c14, %c0_100], %131 {strides = array<i32>} : memref<16x16xf32, #tpu.memory_space<vmem>>, vector<1x16xf32>,
    %c1_101 = arith.constant 1 : index
    %c7_102 = arith.constant 7 : index
    %133 = memref.load %arg1[%c1_101, %c7_102] : memref<2x8xi32, #tpu.memory_space<smem>>
    %134 = arith.index_cast %133 : i32 to index
    %c0_103 = arith.constant 0 : index
    %135 = vector.load %arg7[%134, %c0_103] : memref<50x16xf32, #tpu.memory_space<vmem>>, vector<1x16xf32>
    %136 = arith.addf %135, %97 : vector<1x16xf32>
    %c15 = arith.constant 15 : index
    %c0_104 = arith.constant 0 : index
    %137 = vector.load %arg13[%c15, %c0_104] : memref<16x16xf32, #tpu.memory_space<vmem>>, vector<1x16xf32>
    tpu.vector_store %arg13[%c15, %c0_104], %136 {strides = array<i32>} : memref<16x16xf32, #tpu.memory_space<vmem>>, vector<1x16xf32>,
    %c0_105 = arith.constant 0 : index
    %c0_106 = arith.constant 0 : index
    %138 = vector.load %arg13[%c0_105, %c0_106] : memref<16x16xf32, #tpu.memory_space<vmem>>, vector<16x16xf32>
    %c0_107 = arith.constant 0 : index
    %c0_108 = arith.constant 0 : index
    %139 = vector.load %arg9[%c0_107, %c0_108] : memref<16x50xf32, #tpu.memory_space<vmem>>, vector<16x50xf32>
    %cst_109 = arith.constant dense<0.000000e+00> : vector<16x50xf32>
    %140 = tpu.matmul %138, %139, %cst_109 {dimension_numbers = #tpu.dot_dimension_numbers<[1], [0], [0], [1], [0, 0, 1, 1], [], []>} : vector<16x16xf32>, vector<16x50xf32>, vector<16x50xf32> -> vector<16x50xf32>
    %c0_110 = arith.constant 0 : index
    %c0_111 = arith.constant 0 : index
    %141 = vector.load %arg10[%c0_110, %c0_111] : memref<1x50xf32, #tpu.memory_space<vmem>>, vector<1x50xf32>
    %142 = vector.broadcast %141 : vector<1x50xf32> to vector<16x50xf32>
    %143 = arith.addf %140, %142 : vector<16x50xf32>
    %c0_112 = arith.constant 0 : index
    %c0_113 = arith.constant 0 : index
    %144 = vector.load %arg9[%c0_112, %c0_113] : memref<16x50xf32, #tpu.memory_space<vmem>>, vector<16x50xf32>
    %c0_114 = arith.constant 0 : index
    %c0_115 = arith.constant 0 : index
    %145 = vector.load %arg5[%c0_114, %c0_115] : memref<16x32xf32, #tpu.memory_space<vmem>>, vector<16x32xf32>
    %c0_116 = arith.constant 0 : index
    %c0_117 = arith.constant 0 : index
    %146 = vector.load %arg6[%c0_116, %c0_117] : memref<16x1xf32, #tpu.memory_space<vmem>>, vector<16x1xf32>
    %c0_118 = arith.constant 0 : index
    %c0_119 = arith.constant 0 : index
    %c0_120 = arith.constant 0 : index
    %147 = vector.load %arg4[%c0_118, %c0_119, %c0_120] : memref<2x32x49xf32, #tpu.memory_space<vmem>>, vector<1x32x49xf32>
    %148 = vector.shape_cast %147 : vector<1x32x49xf32> to vector<32x49xf32>
    %cst_121 = arith.constant dense<0.000000e+00> : vector<16x49xf32>
    %149 = tpu.matmul %145, %148, %cst_121 {dimension_numbers = #tpu.dot_dimension_numbers<[1], [0], [0], [1], [0, 0, 1, 1], [], []>} : vector<16x32xf32>, vector<32x49xf32>, vector<16x49xf32> -> vector<16x49xf32>
    %150 = vector.broadcast %146 : vector<16x1xf32> to vector<16x49xf32>
    %151 = arith.addf %149, %150 : vector<16x49xf32>
    %c0_122 = arith.constant 0 : index
    %c0_123 = arith.constant 0 : index
    %152 = vector.load %arg13[%c0_122, %c0_123] : memref<16x16xf32, #tpu.memory_space<vmem>>, vector<8x16xf32>
    %153 = vector.extract_strided_slice %143 {offsets = [0, 0], sizes = [8, 50], strides = [1, 1]} : vector<16x50xf32> to vector<8x50xf32>
    %cst_124 = arith.constant dense<0.000000e+00> : vector<8x49xf32>
    %154 = tpu.matmul %152, %151, %cst_124 {dimension_numbers = #tpu.dot_dimension_numbers<[1], [0], [0], [1], [0, 0, 1, 1], [], []>} : vector<8x16xf32>, vector<16x49xf32>, vector<8x49xf32> -> vector<8x49xf32>
    %cst_125 = arith.constant dense<0xFF800000> : vector<8xf32>
    %155 = vector.multi_reduction <maximumf>, %154, %cst_125 [1] : vector<8x49xf32> to vector<8xf32>
    %156 = vector.shape_cast %155 : vector<8xf32> to vector<8x1xf32>
    %157 = vector.broadcast %156 : vector<8x1xf32> to vector<8x49xf32>
    %158 = arith.subf %154, %157 : vector<8x49xf32>
    %159 = math.exp %158 : vector<8x49xf32>
    %cst_126 = arith.constant dense<0.000000e+00> : vector<8xf32>
    %160 = vector.multi_reduction <add>, %159, %cst_126 [1] : vector<8x49xf32> to vector<8xf32>
    %161 = vector.shape_cast %160 : vector<8xf32> to vector<8x1xf32>
    %162 = vector.broadcast %161 : vector<8x1xf32> to vector<8x49xf32>
    %163 = arith.divf %159, %162 : vector<8x49xf32>
    %cst_127 = arith.constant dense<0.000000e+00> : vector<8x16xf32>
    %164 = tpu.matmul %163, %151, %cst_127 {dimension_numbers = #tpu.dot_dimension_numbers<[1], [1], [0], [0], [0, 0, 1, 0], [], []>} : vector<8x49xf32>, vector<16x49xf32>, vector<8x16xf32> -> vector<8x16xf32>
    %cst_128 = arith.constant dense<0.000000e+00> : vector<8x50xf32>
    %165 = tpu.matmul %164, %144, %cst_128 {dimension_numbers = #tpu.dot_dimension_numbers<[1], [0], [0], [1], [0, 0, 1, 1], [], []>} : vector<8x16xf32>, vector<16x50xf32>, vector<8x50xf32> -> vector<8x50xf32>
    %166 = arith.addf %165, %153 : vector<8x50xf32>
    %c0_129 = arith.constant 0 : index
    %c0_130 = arith.constant 0 : index
    %c0_131 = arith.constant 0 : index
    %167 = vector.load %arg11[%c0_129, %c0_130, %c0_131] : memref<2x8x50xf32, #tpu.memory_space<vmem>>, vector<1x8x50xf32>
    %168 = vector.shape_cast %167 : vector<1x8x50xf32> to vector<8x50xf32>
    %169 = vector.shape_cast %166 : vector<8x50xf32> to vector<1x8x50xf32>
    tpu.vector_store %arg11[%c0_129, %c0_130, %c0_131], %169 {strides = array<i32>} : memref<2x8x50xf32, #tpu.memory_space<vmem>>, vector<1x8x50xf32>,
    %c0_132 = arith.constant 0 : index
    %c0_133 = arith.constant 0 : index
    %c0_134 = arith.constant 0 : index
    %170 = vector.load %arg12[%c0_132, %c0_133, %c0_134] : memref<2x8x49xf32, #tpu.memory_space<vmem>>, vector<1x8x49xf32>
    %171 = vector.shape_cast %170 : vector<1x8x49xf32> to vector<8x49xf32>
    %172 = vector.shape_cast %163 : vector<8x49xf32> to vector<1x8x49xf32>
    tpu.vector_store %arg12[%c0_132, %c0_133, %c0_134], %172 {strides = array<i32>} : memref<2x8x49xf32, #tpu.memory_space<vmem>>, vector<1x8x49xf32>,
    %c1_135 = arith.constant 1 : index
    %c0_136 = arith.constant 0 : index
    %c0_137 = arith.constant 0 : index
    %173 = vector.load %arg4[%c1_135, %c0_136, %c0_137] : memref<2x32x49xf32, #tpu.memory_space<vmem>>, vector<1x32x49xf32>
    %174 = vector.shape_cast %173 : vector<1x32x49xf32> to vector<32x49xf32>
    %cst_138 = arith.constant dense<0.000000e+00> : vector<16x49xf32>
    %175 = tpu.matmul %145, %174, %cst_138 {dimension_numbers = #tpu.dot_dimension_numbers<[1], [0], [0], [1], [0, 0, 1, 1], [], []>} : vector<16x32xf32>, vector<32x49xf32>, vector<16x49xf32> -> vector<16x49xf32>
    %176 = vector.broadcast %146 : vector<16x1xf32> to vector<16x49xf32>
    %177 = arith.addf %175, %176 : vector<16x49xf32>
    %c8_139 = arith.constant 8 : index
    %c0_140 = arith.constant 0 : index
    %178 = vector.load %arg13[%c8_139, %c0_140] : memref<16x16xf32, #tpu.memory_space<vmem>>, vector<8x16xf32>
    %179 = vector.extract_strided_slice %143 {offsets = [8, 0], sizes = [8, 50], strides = [1, 1]} : vector<16x50xf32> to vector<8x50xf32>
    %cst_141 = arith.constant dense<0.000000e+00> : vector<8x49xf32>
    %180 = tpu.matmul %178, %177, %cst_141 {dimension_numbers = #tpu.dot_dimension_numbers<[1], [0], [0], [1], [0, 0, 1, 1], [], []>} : vector<8x16xf32>, vector<16x49xf32>, vector<8x49xf32> -> vector<8x49xf32>
    %cst_142 = arith.constant dense<0xFF800000> : vector<8xf32>
    %181 = vector.multi_reduction <maximumf>, %180, %cst_142 [1] : vector<8x49xf32> to vector<8xf32>
    %182 = vector.shape_cast %181 : vector<8xf32> to vector<8x1xf32>
    %183 = vector.broadcast %182 : vector<8x1xf32> to vector<8x49xf32>
    %184 = arith.subf %180, %183 : vector<8x49xf32>
    %185 = math.exp %184 : vector<8x49xf32>
    %cst_143 = arith.constant dense<0.000000e+00> : vector<8xf32>
    %186 = vector.multi_reduction <add>, %185, %cst_143 [1] : vector<8x49xf32> to vector<8xf32>
    %187 = vector.shape_cast %186 : vector<8xf32> to vector<8x1xf32>
    %188 = vector.broadcast %187 : vector<8x1xf32> to vector<8x49xf32>
    %189 = arith.divf %185, %188 : vector<8x49xf32>
    %cst_144 = arith.constant dense<0.000000e+00> : vector<8x16xf32>
    %190 = tpu.matmul %189, %177, %cst_144 {dimension_numbers = #tpu.dot_dimension_numbers<[1], [1], [0], [0], [0, 0, 1, 0], [], []>} : vector<8x49xf32>, vector<16x49xf32>, vector<8x16xf32> -> vector<8x16xf32>
    %cst_145 = arith.constant dense<0.000000e+00> : vector<8x50xf32>
    %191 = tpu.matmul %190, %144, %cst_145 {dimension_numbers = #tpu.dot_dimension_numbers<[1], [0], [0], [1], [0, 0, 1, 1], [], []>} : vector<8x16xf32>, vector<16x50xf32>, vector<8x50xf32> -> vector<8x50xf32>
    %192 = arith.addf %191, %179 : vector<8x50xf32>
    %c1_146 = arith.constant 1 : index
    %c0_147 = arith.constant 0 : index
    %c0_148 = arith.constant 0 : index
    %193 = vector.load %arg11[%c1_146, %c0_147, %c0_148] : memref<2x8x50xf32, #tpu.memory_space<vmem>>, vector<1x8x50xf32>
    %194 = vector.shape_cast %193 : vector<1x8x50xf32> to vector<8x50xf32>
    %195 = vector.shape_cast %192 : vector<8x50xf32> to vector<1x8x50xf32>
    tpu.vector_store %arg11[%c1_146, %c0_147, %c0_148], %195 {strides = array<i32>} : memref<2x8x50xf32, #tpu.memory_space<vmem>>, vector<1x8x50xf32>,
    %c1_149 = arith.constant 1 : index
    %c0_150 = arith.constant 0 : index
    %c0_151 = arith.constant 0 : index
    %196 = vector.load %arg12[%c1_149, %c0_150, %c0_151] : memref<2x8x49xf32, #tpu.memory_space<vmem>>, vector<1x8x49xf32>
    %197 = vector.shape_cast %196 : vector<1x8x49xf32> to vector<8x49xf32>
    %198 = vector.shape_cast %189 : vector<8x49xf32> to vector<1x8x49xf32>
    tpu.vector_store %arg12[%c1_149, %c0_150, %c0_151], %198 {strides = array<i32>} : memref<2x8x49xf32, #tpu.memory_space<vmem>>, vector<1x8x49xf32>,
    return
  }
  func.func @transform_0(%arg0: i32, %arg1: memref<2x8xi32, #tpu.memory_space<smem>>, %arg2: memref<2x6xi32, #tpu.memory_space<smem>>, %arg3: memref<2xi32, #tpu.memory_space<smem>>) -> (i32, i32, i32) {
    %c0_i32 = arith.constant 0 : i32
    %c0_i32_0 = arith.constant 0 : i32
    %c0_i32_1 = arith.constant 0 : i32
    %c0_i32_2 = arith.constant 0 : i32
    return %c0_i32, %c0_i32_0, %c0_i32_1 : i32, i32, i32
  }
  func.func @transform_1(%arg0: i32, %arg1: memref<2x8xi32, #tpu.memory_space<smem>>, %arg2: memref<2x6xi32, #tpu.memory_space<smem>>, %arg3: memref<2xi32, #tpu.memory_space<smem>>) -> (i32, i32) {
    %c0_i32 = arith.constant 0 : i32
    %c0_i32_0 = arith.constant 0 : i32
    %c0_i32_1 = arith.constant 0 : i32
    return %c0_i32, %c0_i32_0 : i32, i32
  }
  func.func @transform_2(%arg0: i32, %arg1: memref<2x8xi32, #tpu.memory_space<smem>>, %arg2: memref<2x6xi32, #tpu.memory_space<smem>>, %arg3: memref<2xi32, #tpu.memory_space<smem>>) -> (i32, i32) {
    %c0_i32 = arith.constant 0 : i32
    %c0_i32_0 = arith.constant 0 : i32
    %c0_i32_1 = arith.constant 0 : i32
    return %c0_i32, %c0_i32_0 : i32, i32
  }
  func.func @transform_3(%arg0: i32, %arg1: memref<2x8xi32, #tpu.memory_space<smem>>, %arg2: memref<2x6xi32, #tpu.memory_space<smem>>, %arg3: memref<2xi32, #tpu.memory_space<smem>>) -> (i32, i32) {
    %c0_i32 = arith.constant 0 : i32
    %c0_i32_0 = arith.constant 0 : i32
    %c0_i32_1 = arith.constant 0 : i32
    return %c0_i32, %c0_i32_0 : i32, i32
  }
  func.func @transform_4(%arg0: i32, %arg1: memref<2x8xi32, #tpu.memory_space<smem>>, %arg2: memref<2x6xi32, #tpu.memory_space<smem>>, %arg3: memref<2xi32, #tpu.memory_space<smem>>) -> (i32, i32) {
    %c0_i32 = arith.constant 0 : i32
    %c0_i32_0 = arith.constant 0 : i32
    %c0_i32_1 = arith.constant 0 : i32
    return %c0_i32, %c0_i32_0 : i32, i32
  }
  func.func @transform_5(%arg0: i32, %arg1: memref<2x8xi32, #tpu.memory_space<smem>>, %arg2: memref<2x6xi32, #tpu.memory_space<smem>>, %arg3: memref<2xi32, #tpu.memory_space<smem>>) -> (i32, i32) {
    %c0_i32 = arith.constant 0 : i32
    %c0_i32_0 = arith.constant 0 : i32
    %c0_i32_1 = arith.constant 0 : i32
    return %c0_i32, %c0_i32_0 : i32, i32
  }
  func.func @transform_6(%arg0: i32, %arg1: memref<2x8xi32, #tpu.memory_space<smem>>, %arg2: memref<2x6xi32, #tpu.memory_space<smem>>, %arg3: memref<2xi32, #tpu.memory_space<smem>>) -> (i32, i32) {
    %c0_i32 = arith.constant 0 : i32
    %c0_i32_0 = arith.constant 0 : i32
    %c0_i32_1 = arith.constant 0 : i32
    return %c0_i32, %c0_i32_0 : i32, i32
  }
  func.func @transform_7(%arg0: i32, %arg1: memref<2x8xi32, #tpu.memory_space<smem>>, %arg2: memref<2x6xi32, #tpu.memory_space<smem>>, %arg3: memref<2xi32, #tpu.memory_space<smem>>) -> (i32, i32, i32) {
    %c0_i32 = arith.constant 0 : i32
    %c0_i32_0 = arith.constant 0 : i32
    %c0_i32_1 = arith.constant 0 : i32
    %c0_i32_2 = arith.constant 0 : i32
    return %c0_i32, %c0_i32_0, %c0_i32_1 : i32, i32, i32
  }
  func.func @transform_8(%arg0: i32, %arg1: memref<2x8xi32, #tpu.memory_space<smem>>, %arg2: memref<2x6xi32, #tpu.memory_space<smem>>, %arg3: memref<2xi32, #tpu.memory_space<smem>>) -> (i32, i32, i32) {
    %c0_i32 = arith.constant 0 : i32
    %c0_i32_0 = arith.constant 0 : i32
    %c0_i32_1 = arith.constant 0 : i32
    %c0_i32_2 = arith.constant 0 : i32
    return %c0_i32, %c0_i32_0, %c0_i32_1 : i32, i32, i32
  }
}

</mosaic_0001>

<llo_original>
// kernel: tpu_custom_call.1
$region0: #{tpu_custom_call.1}
  #allocation0 [shape = 'u32[]', space=smem, size = 0x4, offset = 0x4, fixed_abs, tag = 'smem constant byte address 0x4 - core index']
  #allocation1 [shape = 'u32[144,128]{1,0:T(1,128)}', space=vmem, size = 0x12000, scoped, tag = 'internal scratch']
  #allocation2 [shape = 'f32[16,16]{1,0:T(8,128)}', space=vmem, size = 0x2000, scoped, tag = 'scratch operand']
  #allocation3 [shape = 'f32[1,16]{1,0:T(1,128)}', space=vmem, size = 0x200, scoped, tag = 'scratch operand']
  #allocation4 [shape = 'f32[1,1]{1,0:T(1,128)}', space=vmem, size = 0x200, scoped, tag = 'scratch operand']
  #allocation5 [shape = 's32[1]{0}', space=sflag, size = 0x4, scoped, tag = 'scoped memory for tpu_custom_call.1']
  #allocation6 [shape = 'u8[1024]{0}', space=smem, size = 0x400, scoped, tag = 'prefetched SMEM operand 0']
  #allocation7 [shape = 'u8[1024]{0}', space=smem, size = 0x400, scoped, tag = 'prefetched SMEM operand 1']
  #allocation8 [shape = 'u8[512]{0}', space=smem, size = 0x200, scoped, tag = 'prefetched SMEM operand 2']
  %s0 = inlined_call_operand.vmem [shape: s32[2,8], index: 0, kind: input, shape index: {}]
  %s1 = inlined_call_operand.vmem [shape: s32[2,6], index: 1, kind: input, shape index: {}]
  %s2 = inlined_call_operand.vmem [shape: s32[2], index: 2, kind: input, shape index: {}]
  %s3 = inlined_call_operand.vmem [shape: f32[2,32,49], index: 3, kind: input, shape index: {}]
  %s4 = inlined_call_operand.vmem [shape: f32[16,32], index: 4, kind: input, shape index: {}]
  %s5 = inlined_call_operand.vmem [shape: f32[16,1], index: 5, kind: input, shape index: {}]
  %s6 = inlined_call_operand.vmem [shape: f32[50,16], index: 6, kind: input, shape index: {}]
  %s7 = inlined_call_operand.vmem [shape: f32[40,16], index: 7, kind: input, shape index: {}]
  %s8 = inlined_call_operand.vmem [shape: f32[16,50], index: 8, kind: input, shape index: {}]
  %s9 = inlined_call_operand.vmem [shape: f32[1,50], index: 9, kind: input, shape index: {}]
  %s10 = inlined_call_operand.hbm [shape: f32[2,8,50], index: 10, kind: output, shape index: {0}]
  %s11 = inlined_call_operand.hbm [shape: f32[2,8,49], index: 11, kind: output, shape index: {1}]
  %12 = xla_tuple %s10, %s11
  %s13 = sld [smem:[#allocation0]]
  $region94: #{tpu_custom_call.1} parent=0
    _
  %s15 = ssub.s32 1, %s13
  %s16 = scalar_select 0, %s15, %s13
  %s17 = sshll.u32 %s0, 4
  %s18 = int_to_ptr.vmem [resolvable:$true] %s17
  %20 = dma.vmem_to_smem %s18, 32, [#allocation6], [#allocation5]
  %s21 = sshll.u32 %s1, 4
  %s22 = int_to_ptr.vmem [resolvable:$true] %s21
  %24 = dma.vmem_to_smem %s22, 32, [#allocation7], [#allocation5]
  %s25 = sshll.u32 %s2, 4
  %s26 = int_to_ptr.vmem [resolvable:$true] %s25
  %28 = dma.vmem_to_smem %s26, 16, [#allocation8], [#allocation5]
  %29 = dma.done [#allocation5], 80
  %30 = sfence
  $region1: #{tpu_custom_call.1} parent=0
    #allocation9 [shape = 'u8[8192]{0}', space=vmem, size = 0x2000, scoped, tag = 'output window, operand 0, single buffered']
    #allocation10 [shape = 's32[1]{0}', space=sflag, size = 0x4, scoped, tag = 'scoped memory for tpu_custom_call.1']
    #allocation11 [shape = 'u8[8192]{0}', space=vmem, size = 0x2000, scoped, tag = 'output window, operand 1, single buffered']
    #allocation12 [shape = 's32[1]{0}', space=sflag, size = 0x4, scoped, tag = 'scoped memory for tpu_custom_call.1']
    %31 = vsyncpa [#allocation10], 0
    %32 = vsyncpa [#allocation12], 0
    // Predicated region
    $region2: #{tpu_custom_call.1} parent=1 // pred_check
      _
    $region3: #{tpu_custom_call.1} parent=1 // pred_check_branch
      %34 = sbr.rel (0) target = $region5
    $region4: #{tpu_custom_call.1} parent=1 // pred_region
      _
    $region5: #{tpu_custom_call.1} parent=1 // pred_fallthru
      _
    // Predicated region
    $region6: #{tpu_custom_call.1} parent=1 // pred_check
      _
    $region7: #{tpu_custom_call.1} parent=1 // pred_check_branch
      %36 = sbr.rel (0) target = $region9
    $region8: #{tpu_custom_call.1} parent=1 // pred_region
      _
    $region9: #{tpu_custom_call.1} parent=1 // pred_fallthru
      _
    // Predicated region
    $region10: #{tpu_custom_call.1} parent=1 // pred_check
      _
    $region11: #{tpu_custom_call.1} parent=1 // pred_check_branch
      %38 = sbr.rel (0) target = $region13
    $region12: #{tpu_custom_call.1} parent=1 // pred_region
      _
    $region13: #{tpu_custom_call.1} parent=1 // pred_fallthru
      _
    // Predicated region
    $region14: #{tpu_custom_call.1} parent=1 // pred_check
      _
    $region15: #{tpu_custom_call.1} parent=1 // pred_check_branch
      %40 = sbr.rel (0) target = $region17
    $region16: #{tpu_custom_call.1} parent=1 // pred_region
      _
    $region17: #{tpu_custom_call.1} parent=1 // pred_fallthru
      _
    // Predicated region
    $region18: #{tpu_custom_call.1} parent=1 // pred_check
      _
    $region19: #{tpu_custom_call.1} parent=1 // pred_check_branch
      %42 = sbr.rel (0) target = $region21
    $region20: #{tpu_custom_call.1} parent=1 // pred_region
      _
    $region21: #{tpu_custom_call.1} parent=1 // pred_fallthru
      _
    // Predicated region
    $region22: #{tpu_custom_call.1} parent=1 // pred_check
      _
    $region23: #{tpu_custom_call.1} parent=1 // pred_check_branch
      %44 = sbr.rel (0) target = $region25
    $region24: #{tpu_custom_call.1} parent=1 // pred_region
      _
    $region25: #{tpu_custom_call.1} parent=1 // pred_fallthru
      _
    // Predicated region
    $region26: #{tpu_custom_call.1} parent=1 // pred_check
      _
    $region27: #{tpu_custom_call.1} parent=1 // pred_check_branch
      %46 = sbr.rel (0) target = $region29
    $region28: #{tpu_custom_call.1} parent=1 // pred_region
      _
    $region29: #{tpu_custom_call.1} parent=1 // pred_fallthru
      _
    %vm47 = vcmask 122880
    %48 = vst.msk [vmem:[#allocation3] sm:$0x1] %vm47, 0.0
    %vm49 = vcmask 0
    %50 = vst.msk [vmem:[#allocation4] sm:$0x1] %vm49, 0.0
    %s51 = sld [smem:[#allocation8]]
    %p52 = scmp.gt.s32.totalorder %s51, 0
    // Predicated region
    $region30: #{tpu_custom_call.1} parent=1 // pred_check
      %p53 = pneg %p52
    $region31: #{tpu_custom_call.1} parent=1 // pred_check_branch
      %55 = sbr.rel (%p53) target = $region33
    $region32: #{tpu_custom_call.1} parent=1 // pred_region
      %s56 = sld [smem:[#allocation7]]
      %v57 = vld [vmem:[#allocation3] sm:$0x1]
      %s58 = scalar_lea.vmem %s7, %s56
      %v59 = vld [vmem:[%s58] sm:$0x1]
      %v60 = vadd.f32 %v57, %v59
      %61 = vst.msk [vmem:[#allocation3] sm:$0x1] %vm47, %v60
      %v62 = vld [vmem:[#allocation4] sm:$0x1]
      %v63 = vadd.f32 %v62, 1.0
      %64 = vst.msk [vmem:[#allocation4] sm:$0x1] %vm49, %v63
    $region33: #{tpu_custom_call.1} parent=1 // pred_fallthru
      _
    %p65 = scmp.gt.s32.totalorder %s51, 1
    // Predicated region
    $region34: #{tpu_custom_call.1} parent=1 // pred_check
      %p66 = pneg %p65
    $region35: #{tpu_custom_call.1} parent=1 // pred_check_branch
      %68 = sbr.rel (%p66) target = $region37
    $region36: #{tpu_custom_call.1} parent=1 // pred_region
      %s69 = sld [smem:[#allocation7 + $0x1]]
      %v70 = vld [vmem:[#allocation3] sm:$0x1]
      %s71 = scalar_lea.vmem %s7, %s69
      %v72 = vld [vmem:[%s71] sm:$0x1]
      %v73 = vadd.f32 %v70, %v72
      %74 = vst.msk [vmem:[#allocation3] sm:$0x1] %vm47, %v73
      %v75 = vld [vmem:[#allocation4] sm:$0x1]
      %v76 = vadd.f32 %v75, 1.0
      %77 = vst.msk [vmem:[#allocation4] sm:$0x1] %vm49, %v76
    $region37: #{tpu_custom_call.1} parent=1 // pred_fallthru
      _
    %p78 = scmp.gt.s32.totalorder %s51, 2
    // Predicated region
    $region38: #{tpu_custom_call.1} parent=1 // pred_check
      %p79 = pneg %p78
    $region39: #{tpu_custom_call.1} parent=1 // pred_check_branch
      %81 = sbr.rel (%p79) target = $region41
    $region40: #{tpu_custom_call.1} parent=1 // pred_region
      %s82 = sld [smem:[#allocation7 + $0x2]]
      %v83 = vld [vmem:[#allocation3] sm:$0x1]
      %s84 = scalar_lea.vmem %s7, %s82
      %v85 = vld [vmem:[%s84] sm:$0x1]
      %v86 = vadd.f32 %v83, %v85
      %87 = vst.msk [vmem:[#allocation3] sm:$0x1] %vm47, %v86
      %v88 = vld [vmem:[#allocation4] sm:$0x1]
      %v89 = vadd.f32 %v88, 1.0
      %90 = vst.msk [vmem:[#allocation4] sm:$0x1] %vm49, %v89
    $region41: #{tpu_custom_call.1} parent=1 // pred_fallthru
      _
    %p91 = scmp.gt.s32.totalorder %s51, 3
    // Predicated region
    $region42: #{tpu_custom_call.1} parent=1 // pred_check
      %p92 = pneg %p91
    $region43: #{tpu_custom_call.1} parent=1 // pred_check_branch
      %94 = sbr.rel (%p92) target = $region45
    $region44: #{tpu_custom_call.1} parent=1 // pred_region
      %s95 = sld [smem:[#allocation7 + $0x3]]
      %v96 = vld [vmem:[#allocation3] sm:$0x1]
      %s97 = scalar_lea.vmem %s7, %s95
      %v98 = vld [vmem:[%s97] sm:$0x1]
      %v99 = vadd.f32 %v96, %v98
      %100 = vst.msk [vmem:[#allocation3] sm:$0x1] %vm47, %v99
      %v101 = vld [vmem:[#allocation4] sm:$0x1]
      %v102 = vadd.f32 %v101, 1.0
      %103 = vst.msk [vmem:[#allocation4] sm:$0x1] %vm49, %v102
    $region45: #{tpu_custom_call.1} parent=1 // pred_fallthru
      _
    %p104 = scmp.gt.s32.totalorder %s51, 4
    // Predicated region
    $region46: #{tpu_custom_call.1} parent=1 // pred_check
      %p105 = pneg %p104
    $region47: #{tpu_custom_call.1} parent=1 // pred_check_branch
      %107 = sbr.rel (%p105) target = $region49
    $region48: #{tpu_custom_call.1} parent=1 // pred_region
      %s108 = sld [smem:[#allocation7 + $0x4]]
      %v109 = vld [vmem:[#allocation3] sm:$0x1]
      %s110 = scalar_lea.vmem %s7, %s108
      %v111 = vld [vmem:[%s110] sm:$0x1]
      %v112 = vadd.f32 %v109, %v111
      %113 = vst.msk [vmem:[#allocation3] sm:$0x1] %vm47, %v112
      %v114 = vld [vmem:[#allocation4] sm:$0x1]
      %v115 = vadd.f32 %v114, 1.0
      %116 = vst.msk [vmem:[#allocation4] sm:$0x1] %vm49, %v115
    $region49: #{tpu_custom_call.1} parent=1 // pred_fallthru
      _
    %p117 = scmp.gt.s32.totalorder %s51, 5
    // Predicated region
    $region50: #{tpu_custom_call.1} parent=1 // pred_check
      %p118 = pneg %p117
    $region51: #{tpu_custom_call.1} parent=1 // pred_check_branch
      %120 = sbr.rel (%p118) target = $region53
    $region52: #{tpu_custom_call.1} parent=1 // pred_region
      %s121 = sld [smem:[#allocation7 + $0x5]]
      %v122 = vld [vmem:[#allocation3] sm:$0x1]
      %s123 = scalar_lea.vmem %s7, %s121
      %v124 = vld [vmem:[%s123] sm:$0x1]
      %v125 = vadd.f32 %v122, %v124
      %126 = vst.msk [vmem:[#allocation3] sm:$0x1] %vm47, %v125
      %v127 = vld [vmem:[#allocation4] sm:$0x1]
      %v128 = vadd.f32 %v127, 1.0
      %129 = vst.msk [vmem:[#allocation4] sm:$0x1] %vm49, %v128
    $region53: #{tpu_custom_call.1} parent=1 // pred_fallthru
      _
    %v130 = vld [vmem:[#allocation3] sm:$0x1]
    %v131 = vld [vmem:[#allocation4] sm:$0x1]
    %v132 = vmax.f32 %v131, 1.0
    %134 = vset.pattern.permute.xlu0 0
    %135 = vperm.xlu0 %134, %v132
    %v136 = vpop.permute.xlu0 %135
    %v138 = vlaneseq
    %v139 = vshrl.u32 %v138, 7
    %v140 = vsub.s32 0, %v139
    %v141 = vrot.slane %v136, %v140
    %v142 = vrcp.pop %v141
    %v143 = vmul.f32 %v130, %v142
    %s144 = sld [smem:[#allocation6]]
    %s145 = scalar_lea.vmem %s6, %s144
    %v146 = vld [vmem:[%s145] sm:$0x1]
    %v147 = vadd.f32 %v146, %v143
    %148 = vst.msk [vmem:[#allocation2] sm:$0x1] %vm47, %v147
    %s149 = sld [smem:[#allocation6 + $0x1]]
    %s150 = scalar_lea.vmem %s6, %s149
    %v151 = vld [vmem:[%s150] sm:$0x1]
    %v152 = vadd.f32 %v151, %v143
    %153 = vst.msk [vmem:[#allocation2 + $0x1] sm:$0x1] %vm47, %v152
    %s154 = sld [smem:[#allocation6 + $0x2]]
    %s155 = scalar_lea.vmem %s6, %s154
    %v156 = vld [vmem:[%s155] sm:$0x1]
    %v157 = vadd.f32 %v156, %v143
    %158 = vst.msk [vmem:[#allocation2 + $0x2] sm:$0x1] %vm47, %v157
    %s159 = sld [smem:[#allocation6 + $0x3]]
    %s160 = scalar_lea.vmem %s6, %s159
    %v161 = vld [vmem:[%s160] sm:$0x1]
    %v162 = vadd.f32 %v161, %v143
    %163 = vst.msk [vmem:[#allocation2 + $0x3] sm:$0x1] %vm47, %v162
    %s164 = sld [smem:[#allocation6 + $0x4]]
    %s165 = scalar_lea.vmem %s6, %s164
    %v166 = vld [vmem:[%s165] sm:$0x1]
    %v167 = vadd.f32 %v166, %v143
    %168 = vst.msk [vmem:[#allocation2 + $0x4] sm:$0x1] %vm47, %v167
    %s169 = sld [smem:[#allocation6 + $0x5]]
    %s170 = scalar_lea.vmem %s6, %s169
    %v171 = vld [vmem:[%s170] sm:$0x1]
    %v172 = vadd.f32 %v171, %v143
    %173 = vst.msk [vmem:[#allocation2 + $0x5] sm:$0x1] %vm47, %v172
    %s174 = sld [smem:[#allocation6 + $0x6]]
    %s175 = scalar_lea.vmem %s6, %s174
    %v176 = vld [vmem:[%s175] sm:$0x1]
    %v177 = vadd.f32 %v176, %v143
    %178 = vst.msk [vmem:[#allocation2 + $0x6] sm:$0x1] %vm47, %v177
    %s179 = sld [smem:[#allocation6 + $0x7]]
    %s180 = scalar_lea.vmem %s6, %s179
    %v181 = vld [vmem:[%s180] sm:$0x1]
    %v182 = vadd.f32 %v181, %v143
    %183 = vst.msk [vmem:[#allocation2 + $0x7] sm:$0x1] %vm47, %v182
    %184 = vst.msk [vmem:[#allocation3] sm:$0x1] %vm47, 0.0
    %185 = vst.msk [vmem:[#allocation4] sm:$0x1] %vm49, 0.0
    %s186 = sld [smem:[#allocation8 + $0x1]]
    %p187 = scmp.gt.s32.totalorder %s186, 0
    // Predicated region
    $region54: #{tpu_custom_call.1} parent=1 // pred_check
      %p188 = pneg %p187
    $region55: #{tpu_custom_call.1} parent=1 // pred_check_branch
      %190 = sbr.rel (%p188) target = $region57
    $region56: #{tpu_custom_call.1} parent=1 // pred_region
      %s191 = sld [smem:[#allocation7 + $0x80]]
      %v192 = vld [vmem:[#allocation3] sm:$0x1]
      %s193 = scalar_lea.vmem %s7, %s191
      %v194 = vld [vmem:[%s193] sm:$0x1]
      %v195 = vadd.f32 %v192, %v194
      %196 = vst.msk [vmem:[#allocation3] sm:$0x1] %vm47, %v195
      %v197 = vld [vmem:[#allocation4] sm:$0x1]
      %v198 = vadd.f32 %v197, 1.0
      %199 = vst.msk [vmem:[#allocation4] sm:$0x1] %vm49, %v198
    $region57: #{tpu_custom_call.1} parent=1 // pred_fallthru
      _
    %p200 = scmp.gt.s32.totalorder %s186, 1
    // Predicated region
    $region58: #{tpu_custom_call.1} parent=1 // pred_check
      %p201 = pneg %p200
    $region59: #{tpu_custom_call.1} parent=1 // pred_check_branch
      %203 = sbr.rel (%p201) target = $region61
    $region60: #{tpu_custom_call.1} parent=1 // pred_region
      %s204 = sld [smem:[#allocation7 + $0x81]]
      %v205 = vld [vmem:[#allocation3] sm:$0x1]
      %s206 = scalar_lea.vmem %s7, %s204
      %v207 = vld [vmem:[%s206] sm:$0x1]
      %v208 = vadd.f32 %v205, %v207
      %209 = vst.msk [vmem:[#allocation3] sm:$0x1] %vm47, %v208
      %v210 = vld [vmem:[#allocation4] sm:$0x1]
      %v211 = vadd.f32 %v210, 1.0
      %212 = vst.msk [vmem:[#allocation4] sm:$0x1] %vm49, %v211
    $region61: #{tpu_custom_call.1} parent=1 // pred_fallthru
      _
    %p213 = scmp.gt.s32.totalorder %s186, 2
    // Predicated region
    $region62: #{tpu_custom_call.1} parent=1 // pred_check
      %p214 = pneg %p213
    $region63: #{tpu_custom_call.1} parent=1 // pred_check_branch
      %216 = sbr.rel (%p214) target = $region65
    $region64: #{tpu_custom_call.1} parent=1 // pred_region
      %s217 = sld [smem:[#allocation7 + $0x82]]
      %v218 = vld [vmem:[#allocation3] sm:$0x1]
      %s219 = scalar_lea.vmem %s7, %s217
      %v220 = vld [vmem:[%s219] sm:$0x1]
      %v221 = vadd.f32 %v218, %v220
      %222 = vst.msk [vmem:[#allocation3] sm:$0x1] %vm47, %v221
      %v223 = vld [vmem:[#allocation4] sm:$0x1]
      %v224 = vadd.f32 %v223, 1.0
      %225 = vst.msk [vmem:[#allocation4] sm:$0x1] %vm49, %v224
    $region65: #{tpu_custom_call.1} parent=1 // pred_fallthru
      _
    %p226 = scmp.gt.s32.totalorder %s186, 3
    // Predicated region
    $region66: #{tpu_custom_call.1} parent=1 // pred_check
      %p227 = pneg %p226
    $region67: #{tpu_custom_call.1} parent=1 // pred_check_branch
      %229 = sbr.rel (%p227) target = $region69
    $region68: #{tpu_custom_call.1} parent=1 // pred_region
      %s230 = sld [smem:[#allocation7 + $0x83]]
      %v231 = vld [vmem:[#allocation3] sm:$0x1]
      %s232 = scalar_lea.vmem %s7, %s230
      %v233 = vld [vmem:[%s232] sm:$0x1]
      %v234 = vadd.f32 %v231, %v233
      %235 = vst.msk [vmem:[#allocation3] sm:$0x1] %vm47, %v234
      %v236 = vld [vmem:[#allocation4] sm:$0x1]
      %v237 = vadd.f32 %v236, 1.0
      %238 = vst.msk [vmem:[#allocation4] sm:$0x1] %vm49, %v237
    $region69: #{tpu_custom_call.1} parent=1 // pred_fallthru
      _
    %p239 = scmp.gt.s32.totalorder %s186, 4
    // Predicated region
    $region70: #{tpu_custom_call.1} parent=1 // pred_check
      %p240 = pneg %p239
    $region71: #{tpu_custom_call.1} parent=1 // pred_check_branch
      %242 = sbr.rel (%p240) target = $region73
    $region72: #{tpu_custom_call.1} parent=1 // pred_region
      %s243 = sld [smem:[#allocation7 + $0x84]]
      %v244 = vld [vmem:[#allocation3] sm:$0x1]
      %s245 = scalar_lea.vmem %s7, %s243
      %v246 = vld [vmem:[%s245] sm:$0x1]
      %v247 = vadd.f32 %v244, %v246
      %248 = vst.msk [vmem:[#allocation3] sm:$0x1] %vm47, %v247
      %v249 = vld [vmem:[#allocation4] sm:$0x1]
      %v250 = vadd.f32 %v249, 1.0
      %251 = vst.msk [vmem:[#allocation4] sm:$0x1] %vm49, %v250
    $region73: #{tpu_custom_call.1} parent=1 // pred_fallthru
      _
    %p252 = scmp.gt.s32.totalorder %s186, 5
    // Predicated region
    $region74: #{tpu_custom_call.1} parent=1 // pred_check
      %p253 = pneg %p252
    $region75: #{tpu_custom_call.1} parent=1 // pred_check_branch
      %255 = sbr.rel (%p253) target = $region77
    $region76: #{tpu_custom_call.1} parent=1 // pred_region
      %s256 = sld [smem:[#allocation7 + $0x85]]
      %v257 = vld [vmem:[#allocation3] sm:$0x1]
      %s258 = scalar_lea.vmem %s7, %s256
      %v259 = vld [vmem:[%s258] sm:$0x1]
      %v260 = vadd.f32 %v257, %v259
      %261 = vst.msk [vmem:[#allocation3] sm:$0x1] %vm47, %v260
      %v262 = vld [vmem:[#allocation4] sm:$0x1]
      %v263 = vadd.f32 %v262, 1.0
      %264 = vst.msk [vmem:[#allocation4] sm:$0x1] %vm49, %v263
    $region77: #{tpu_custom_call.1} parent=1 // pred_fallthru
      _
    %v265 = vld [vmem:[#allocation3] sm:$0x1]
    %v266 = vld [vmem:[#allocation4] sm:$0x1]
    %v267 = vmax.f32 %v266, 1.0
    %269 = vset.pattern.permute.xlu0 0
    %270 = vperm.xlu0 %269, %v267
    %v271 = vpop.permute.xlu0 %270
    %v273 = vlaneseq
    %v274 = vshrl.u32 %v273, 7
    %v275 = vsub.s32 0, %v274
    %v276 = vrot.slane %v271, %v275
    %v277 = vrcp.pop %v276
    %v278 = vmul.f32 %v265, %v277
    %s279 = sld [smem:[#allocation6 + $0x80]]
    %s280 = scalar_lea.vmem %s6, %s279
    %v281 = vld [vmem:[%s280] sm:$0x1]
    %v282 = vadd.f32 %v281, %v278
    %283 = vst.msk [vmem:[#allocation2 + $0x8] sm:$0x1] %vm47, %v282
    %s284 = sld [smem:[#allocation6 + $0x81]]
    %s285 = scalar_lea.vmem %s6, %s284
    %v286 = vld [vmem:[%s285] sm:$0x1]
    %v287 = vadd.f32 %v286, %v278
    %288 = vst.msk [vmem:[#allocation2 + $0x9] sm:$0x1] %vm47, %v287
    %s289 = sld [smem:[#allocation6 + $0x82]]
    %s290 = scalar_lea.vmem %s6, %s289
    %v291 = vld [vmem:[%s290] sm:$0x1]
    %v292 = vadd.f32 %v291, %v278
    %293 = vst.msk [vmem:[#allocation2 + $0xa] sm:$0x1] %vm47, %v292
    %s294 = sld [smem:[#allocation6 + $0x83]]
    %s295 = scalar_lea.vmem %s6, %s294
    %v296 = vld [vmem:[%s295] sm:$0x1]
    %v297 = vadd.f32 %v296, %v278
    %298 = vst.msk [vmem:[#allocation2 + $0xb] sm:$0x1] %vm47, %v297
    %s299 = sld [smem:[#allocation6 + $0x84]]
    %s300 = scalar_lea.vmem %s6, %s299
    %v301 = vld [vmem:[%s300] sm:$0x1]
    %v302 = vadd.f32 %v301, %v278
    %303 = vst.msk [vmem:[#allocation2 + $0xc] sm:$0x1] %vm47, %v302
    %s304 = sld [smem:[#allocation6 + $0x85]]
    %s305 = scalar_lea.vmem %s6, %s304
    %v306 = vld [vmem:[%s305] sm:$0x1]
    %v307 = vadd.f32 %v306, %v278
    %308 = vst.msk [vmem:[#allocation2 + $0xd] sm:$0x1] %vm47, %v307
    %s309 = sld [smem:[#allocation6 + $0x86]]
    %s310 = scalar_lea.vmem %s6, %s309
    %v311 = vld [vmem:[%s310] sm:$0x1]
    %v312 = vadd.f32 %v311, %v278
    %313 = vst.msk [vmem:[#allocation2 + $0xe] sm:$0x1] %vm47, %v312
    %s314 = sld [smem:[#allocation6 + $0x87]]
    %s315 = scalar_lea.vmem %s6, %s314
    %v316 = vld [vmem:[%s315] sm:$0x1]
    %v317 = vadd.f32 %v316, %v278
    %318 = vst.msk [vmem:[#allocation2 + $0xf] sm:$0x1] %vm47, %v317
    %v319 = vld [vmem:[#allocation2] sm:$0xff]
    %v320 = vld [vmem:[#allocation2 + $0x8] sm:$0xff]
    %v321 = vld [vmem:[%s8] sm:$0xff]
    %v322 = vld [vmem:[%s8 + $0x8] sm:$0xff]
    %v323 = vld [vmem:[%s9] sm:$0x1]
    %v325 = vlaneseq
    %v326 = vshrl.u32 %v325, 7
    %v327 = vsub.s32 0, %v326
    %v328 = vrot.slane %v323, %v327
    %vm330 = vcmask 130048
    %v332 = vsel %vm330, %v319, 0
    %v335 = vsel %vm330, %v320, 0
    %337 = vmatprep.subr.mxu0 0.0
    %338 = vmatpush1.msra.mxu0 0.0
    %339 = vmatprep.subr.mxu0 0.0
    %340 = vmatpush1.msra.mxu0 0.0
    %341 = vmatprep.subr.mxu0 0.0
    %342 = vmatpush1.msra.mxu0 0.0
    %343 = vmatprep.subr.mxu0 0.0
    %344 = vmatpush1.msra.mxu0 0.0
    %345 = vmatprep.subr.mxu0 0.0
    %346 = vmatpush1.msra.mxu0 0.0
    %347 = vmatprep.subr.mxu0 0.0
    %348 = vmatpush1.msra.mxu0 0.0
    %349 = vmatprep.subr.mxu0 0.0
    %350 = vmatpush1.msra.mxu0 0.0
    %351 = vmatprep.subr.mxu0 0.0
    %352 = vmatpush1.msra.mxu0 0.0
    %353 = vmatprep.subr.mxu0 0.0
    %354 = vmatpush1.msra.mxu0 0.0
    %355 = vmatprep.subr.mxu0 0.0
    %356 = vmatpush1.msra.mxu0 0.0
    %357 = vmatprep.subr.mxu0 0.0
    %358 = vmatpush1.msra.mxu0 0.0
    %359 = vmatprep.subr.mxu0 0.0
    %360 = vmatpush1.msra.mxu0 0.0
    %361 = vmatprep.subr.mxu0 0.0
    %362 = vmatpush1.msra.mxu0 0.0
    %363 = vmatprep.subr.mxu0 0.0
    %364 = vmatpush1.msra.mxu0 0.0
    %365 = vmatprep.subr.mxu0 0.0
    %366 = vmatpush1.msra.mxu0 %v322
    %367 = vmatprep.subr.mxu0 0.0
    %368 = vmatpush1.msra.mxu0 %v321
    %369 = vmatprep.subr.mxu0 0.0
    %370 = vmatpush2.msra.mxu0 0.0
    %371 = vmatprep.subr.mxu0 0.0
    %372 = vmatpush2.msra.mxu0 0.0
    %373 = vmatprep.subr.mxu0 0.0
    %374 = vmatpush2.msra.mxu0 0.0
    %375 = vmatprep.subr.mxu0 0.0
    %376 = vmatpush2.msra.mxu0 0.0
    %377 = vmatprep.subr.mxu0 0.0
    %378 = vmatpush2.msra.mxu0 0.0
    %379 = vmatprep.subr.mxu0 0.0
    %380 = vmatpush2.msra.mxu0 0.0
    %381 = vmatprep.subr.mxu0 0.0
    %382 = vmatpush2.msra.mxu0 0.0
    %383 = vmatprep.subr.mxu0 0.0
    %384 = vmatpush2.msra.mxu0 0.0
    %385 = vmatprep.subr.mxu0 0.0
    %386 = vmatpush2.msra.mxu0 0.0
    %387 = vmatprep.subr.mxu0 0.0
    %388 = vmatpush2.msra.mxu0 0.0
    %389 = vmatprep.subr.mxu0 0.0
    %390 = vmatpush2.msra.mxu0 0.0
    %391 = vmatprep.subr.mxu0 0.0
    %392 = vmatpush2.msra.mxu0 0.0
    %393 = vmatprep.subr.mxu0 0.0
    %394 = vmatpush2.msra.mxu0 0.0
    %395 = vmatprep.subr.mxu0 0.0
    %396 = vmatpush2.msra.mxu0 0.0
    %397 = vmatprep.subr.mxu0 0.0
    %398 = vmatpush2.msra.mxu0 0.0
    %399 = vmatprep.subr.mxu0 0.0
    %400 = vmatpush2.msra.mxu0 0.0
    %401 = vmatprep.mubr.f32.mxu0 0.0
    %402 = vmatmul.mubr.f32.gmra.mxu0 %v332
    %v403 = vpop.f32.mrf.mxu0
    %v404 = vadd.f32 %v328, %v403
    %v405 = vpop.f32.mrf.mxu0
    %406 = vmatprep.mubr.f32.mxu0 0.0
    %407 = vmatmul.mubr.f32.gmra.mxu0 %v335
    %v408 = vpop.f32.mrf.mxu0
    %v409 = vadd.f32 %v328, %v408
    %v410 = vpop.f32.mrf.mxu0
    %411 = vdwg.mxu0
    %v412 = vld [vmem:[%s4] sm:$0xff]
    %v413 = vld [vmem:[%s4 + $0x8] sm:$0xff]
    %v414 = vld [vmem:[%s5] sm:$0xff]
    %v415 = vld [vmem:[%s5 + $0x8] sm:$0xff]
    %v416 = vld [vmem:[%s3] sm:$0xff]
    %v417 = vld [vmem:[%s3 + $0x8] sm:$0xff]
    %v418 = vld [vmem:[%s3 + $0x10] sm:$0xff]
    %v419 = vld [vmem:[%s3 + $0x18] sm:$0xff]
    %421 = vset.pattern.permute.xlu0 0
    %422 = vperm.xlu0 %421, %v414
    %v423 = vpop.permute.xlu0 %422
    %426 = vset.pattern.permute.xlu0 0
    %427 = vperm.xlu0 %426, %v415
    %v428 = vpop.permute.xlu0 %427
    %vm430 = vcmask 261120
    %v432 = vsel %vm430, %v412, 0
    %v435 = vsel %vm430, %v413, 0
    %437 = vmatprep.subr.mxu0 0.0
    %438 = vmatpush1.msra.mxu0 0.0
    %439 = vmatprep.subr.mxu0 0.0
    %440 = vmatpush1.msra.mxu0 0.0
    %441 = vmatprep.subr.mxu0 0.0
    %442 = vmatpush1.msra.mxu0 0.0
    %443 = vmatprep.subr.mxu0 0.0
    %444 = vmatpush1.msra.mxu0 0.0
    %445 = vmatprep.subr.mxu0 0.0
    %446 = vmatpush1.msra.mxu0 0.0
    %447 = vmatprep.subr.mxu0 0.0
    %448 = vmatpush1.msra.mxu0 0.0
    %449 = vmatprep.subr.mxu0 0.0
    %450 = vmatpush1.msra.mxu0 0.0
    %451 = vmatprep.subr.mxu0 0.0
    %452 = vmatpush1.msra.mxu0 0.0
    %453 = vmatprep.subr.mxu0 0.0
    %454 = vmatpush1.msra.mxu0 0.0
    %455 = vmatprep.subr.mxu0 0.0
    %456 = vmatpush1.msra.mxu0 0.0
    %457 = vmatprep.subr.mxu0 0.0
    %458 = vmatpush1.msra.mxu0 0.0
    %459 = vmatprep.subr.mxu0 0.0
    %460 = vmatpush1.msra.mxu0 0.0
    %461 = vmatprep.subr.mxu0 0.0
    %462 = vmatpush1.msra.mxu0 %v419
    %463 = vmatprep.subr.mxu0 0.0
    %464 = vmatpush1.msra.mxu0 %v418
    %465 = vmatprep.subr.mxu0 0.0
    %466 = vmatpush1.msra.mxu0 %v417
    %467 = vmatprep.subr.mxu0 0.0
    %468 = vmatpush1.msra.mxu0 %v416
    %469 = vmatprep.subr.mxu0 0.0
    %470 = vmatpush2.msra.mxu0 0.0
    %471 = vmatprep.subr.mxu0 0.0
    %472 = vmatpush2.msra.mxu0 0.0
    %473 = vmatprep.subr.mxu0 0.0
    %474 = vmatpush2.msra.mxu0 0.0
    %475 = vmatprep.subr.mxu0 0.0
    %476 = vmatpush2.msra.mxu0 0.0
    %477 = vmatprep.subr.mxu0 0.0
    %478 = vmatpush2.msra.mxu0 0.0
    %479 = vmatprep.subr.mxu0 0.0
    %480 = vmatpush2.msra.mxu0 0.0
    %481 = vmatprep.subr.mxu0 0.0
    %482 = vmatpush2.msra.mxu0 0.0
    %483 = vmatprep.subr.mxu0 0.0
    %484 = vmatpush2.msra.mxu0 0.0
    %485 = vmatprep.subr.mxu0 0.0
    %486 = vmatpush2.msra.mxu0 0.0
    %487 = vmatprep.subr.mxu0 0.0
    %488 = vmatpush2.msra.mxu0 0.0
    %489 = vmatprep.subr.mxu0 0.0
    %490 = vmatpush2.msra.mxu0 0.0
    %491 = vmatprep.subr.mxu0 0.0
    %492 = vmatpush2.msra.mxu0 0.0
    %493 = vmatprep.subr.mxu0 0.0
    %494 = vmatpush2.msra.mxu0 0.0
    %495 = vmatprep.subr.mxu0 0.0
    %496 = vmatpush2.msra.mxu0 0.0
    %497 = vmatprep.subr.mxu0 0.0
    %498 = vmatpush2.msra.mxu0 0.0
    %499 = vmatprep.subr.mxu0 0.0
    %500 = vmatpush2.msra.mxu0 0.0
    %501 = vmatprep.mubr.f32.mxu0 0.0
    %502 = vmatmul.mubr.f32.gmra.mxu0 %v432
    %v503 = vpop.f32.mrf.mxu0
    %v504 = vadd.f32 %v423, %v503
    %v505 = vpop.f32.mrf.mxu0
    %506 = vmatprep.mubr.f32.mxu0 0.0
    %507 = vmatmul.mubr.f32.gmra.mxu0 %v435
    %v508 = vpop.f32.mrf.mxu0
    %v509 = vadd.f32 %v428, %v508
    %v510 = vpop.f32.mrf.mxu0
    %511 = vdwg.mxu0
    %v512 = vld [vmem:[#allocation2] sm:$0xff]
    %v514 = vsel %vm330, %v512, 0
    %516 = vmatprep.subr.mxu0 0.0
    %517 = vmatpush1.msra.mxu0 0.0
    %518 = vmatprep.subr.mxu0 0.0
    %519 = vmatpush1.msra.mxu0 0.0
    %520 = vmatprep.subr.mxu0 0.0
    %521 = vmatpush1.msra.mxu0 0.0
    %522 = vmatprep.subr.mxu0 0.0
    %523 = vmatpush1.msra.mxu0 0.0
    %524 = vmatprep.subr.mxu0 0.0
    %525 = vmatpush1.msra.mxu0 0.0
    %526 = vmatprep.subr.mxu0 0.0
    %527 = vmatpush1.msra.mxu0 0.0
    %528 = vmatprep.subr.mxu0 0.0
    %529 = vmatpush1.msra.mxu0 0.0
    %530 = vmatprep.subr.mxu0 0.0
    %531 = vmatpush1.msra.mxu0 0.0
    %532 = vmatprep.subr.mxu0 0.0
    %533 = vmatpush1.msra.mxu0 0.0
    %534 = vmatprep.subr.mxu0 0.0
    %535 = vmatpush1.msra.mxu0 0.0
    %536 = vmatprep.subr.mxu0 0.0
    %537 = vmatpush1.msra.mxu0 0.0
    %538 = vmatprep.subr.mxu0 0.0
    %539 = vmatpush1.msra.mxu0 0.0
    %540 = vmatprep.subr.mxu0 0.0
    %541 = vmatpush1.msra.mxu0 0.0
    %542 = vmatprep.subr.mxu0 0.0
    %543 = vmatpush1.msra.mxu0 0.0
    %544 = vmatprep.subr.mxu0 0.0
    %545 = vmatpush1.msra.mxu0 %v509
    %546 = vmatprep.subr.mxu0 0.0
    %547 = vmatpush1.msra.mxu0 %v504
    %548 = vmatprep.subr.mxu0 0.0
    %549 = vmatpush2.msra.mxu0 0.0
    %550 = vmatprep.subr.mxu0 0.0
    %551 = vmatpush2.msra.mxu0 0.0
    %552 = vmatprep.subr.mxu0 0.0
    %553 = vmatpush2.msra.mxu0 0.0
    %554 = vmatprep.subr.mxu0 0.0
    %555 = vmatpush2.msra.mxu0 0.0
    %556 = vmatprep.subr.mxu0 0.0
    %557 = vmatpush2.msra.mxu0 0.0
    %558 = vmatprep.subr.mxu0 0.0
    %559 = vmatpush2.msra.mxu0 0.0
    %560 = vmatprep.subr.mxu0 0.0
    %561 = vmatpush2.msra.mxu0 0.0
    %562 = vmatprep.subr.mxu0 0.0
    %563 = vmatpush2.msra.mxu0 0.0
    %564 = vmatprep.subr.mxu0 0.0
    %565 = vmatpush2.msra.mxu0 0.0
    %566 = vmatprep.subr.mxu0 0.0
    %567 = vmatpush2.msra.mxu0 0.0
    %568 = vmatprep.subr.mxu0 0.0
    %569 = vmatpush2.msra.mxu0 0.0
    %570 = vmatprep.subr.mxu0 0.0
    %571 = vmatpush2.msra.mxu0 0.0
    %572 = vmatprep.subr.mxu0 0.0
    %573 = vmatpush2.msra.mxu0 0.0
    %574 = vmatprep.subr.mxu0 0.0
    %575 = vmatpush2.msra.mxu0 0.0
    %576 = vmatprep.subr.mxu0 0.0
    %577 = vmatpush2.msra.mxu0 0.0
    %578 = vmatprep.subr.mxu0 0.0
    %579 = vmatpush2.msra.mxu0 0.0
    %580 = vmatprep.mubr.f32.mxu0 0.0
    %581 = vmatmul.mubr.f32.gmra.mxu0 %v514
    %v582 = vpop.f32.mrf.mxu0
    %v583 = vadd.f32 0.0, %v582
    %v584 = vpop.f32.mrf.mxu0
    %585 = vdwg.mxu0
    %vm586 = vcmask 400384
    %v587 = vsel %vm586, %v583, -inf
    %588 = vmax.xlane.f32.xlu0 %v587
    %v589 = vpop.xlane.xlu0 %588
    %v590 = vsub.f32 %v583, %v589
    %v591 = vmul.f32 %v590, 1.442695
    %v592 = vpow.pop %v591
    %v593 = vsel %vm586, %v592, 0.0
    %594 = vadd.xlane.f32.xlu0 %v593
    %v595 = vpop.xlane.xlu0 %594
    %v596 = vrcp.pop %v595
    %v597 = vmul.f32 %v592, %v596
    %v599 = vsel %vm586, %v597, 0
    %v602 = vsel %vm586, %v504, 0
    %v605 = vsel %vm586, %v509, 0
    %607 = vmatprep.subr.mxu0 0.0
    %608 = vmatpush1.xpose.msra.mxu0 0.0
    %609 = vmatprep.subr.mxu0 0.0
    %610 = vmatpush1.xpose.msra.mxu0 0.0
    %611 = vmatprep.subr.mxu0 0.0
    %612 = vmatpush1.xpose.msra.mxu0 0.0
    %613 = vmatprep.subr.mxu0 0.0
    %614 = vmatpush1.xpose.msra.mxu0 0.0
    %615 = vmatprep.subr.mxu0 0.0
    %616 = vmatpush1.xpose.msra.mxu0 0.0
    %617 = vmatprep.subr.mxu0 0.0
    %618 = vmatpush1.xpose.msra.mxu0 0.0
    %619 = vmatprep.subr.mxu0 0.0
    %620 = vmatpush1.xpose.msra.mxu0 0.0
    %621 = vmatprep.subr.mxu0 0.0
    %622 = vmatpush1.xpose.msra.mxu0 0.0
    %623 = vmatprep.subr.mxu0 0.0
    %624 = vmatpush1.xpose.msra.mxu0 0.0
    %625 = vmatprep.subr.mxu0 0.0
    %626 = vmatpush1.xpose.msra.mxu0 0.0
    %627 = vmatprep.subr.mxu0 0.0
    %628 = vmatpush1.xpose.msra.mxu0 0.0
    %629 = vmatprep.subr.mxu0 0.0
    %630 = vmatpush1.xpose.msra.mxu0 0.0
    %631 = vmatprep.subr.mxu0 0.0
    %632 = vmatpush1.xpose.msra.mxu0 0.0
    %633 = vmatprep.subr.mxu0 0.0
    %634 = vmatpush1.xpose.msra.mxu0 0.0
    %635 = vmatprep.subr.mxu0 0.0
    %636 = vmatpush1.xpose.msra.mxu0 %v605
    %637 = vmatprep.subr.mxu0 0.0
    %638 = vmatpush1.xpose.msra.mxu0 %v602
    %639 = vmatprep.subr.mxu0 0.0
    %640 = vmatpush2.xpose.msra.mxu0 0.0
    %641 = vmatprep.subr.mxu0 0.0
    %642 = vmatpush2.xpose.msra.mxu0 0.0
    %643 = vmatprep.subr.mxu0 0.0
    %644 = vmatpush2.xpose.msra.mxu0 0.0
    %645 = vmatprep.subr.mxu0 0.0
    %646 = vmatpush2.xpose.msra.mxu0 0.0
    %647 = vmatprep.subr.mxu0 0.0
    %648 = vmatpush2.xpose.msra.mxu0 0.0
    %649 = vmatprep.subr.mxu0 0.0
    %650 = vmatpush2.xpose.msra.mxu0 0.0
    %651 = vmatprep.subr.mxu0 0.0
    %652 = vmatpush2.xpose.msra.mxu0 0.0
    %653 = vmatprep.subr.mxu0 0.0
    %654 = vmatpush2.xpose.msra.mxu0 0.0
    %655 = vmatprep.subr.mxu0 0.0
    %656 = vmatpush2.xpose.msra.mxu0 0.0
    %657 = vmatprep.subr.mxu0 0.0
    %658 = vmatpush2.xpose.msra.mxu0 0.0
    %659 = vmatprep.subr.mxu0 0.0
    %660 = vmatpush2.xpose.msra.mxu0 0.0
    %661 = vmatprep.subr.mxu0 0.0
    %662 = vmatpush2.xpose.msra.mxu0 0.0
    %663 = vmatprep.subr.mxu0 0.0
    %664 = vmatpush2.xpose.msra.mxu0 0.0
    %665 = vmatprep.subr.mxu0 0.0
    %666 = vmatpush2.xpose.msra.mxu0 0.0
    %667 = vmatprep.subr.mxu0 0.0
    %668 = vmatpush2.xpose.msra.mxu0 0.0
    %669 = vmatprep.subr.mxu0 0.0
    %670 = vmatpush2.xpose.msra.mxu0 0.0
    %671 = vmatprep.mubr.f32.mxu0 0.0
    %672 = vmatmul.mubr.f32.gmra.mxu0 %v599
    %v673 = vpop.f32.mrf.mxu0
    %v674 = vadd.f32 0.0, %v673
    %v675 = vpop.f32.mrf.mxu0
    %676 = vdwg.mxu0
    %v678 = vsel %vm330, %v674, 0
    %680 = vmatprep.subr.mxu0 0.0
    %681 = vmatpush1.msra.mxu0 0.0
    %682 = vmatprep.subr.mxu0 0.0
    %683 = vmatpush1.msra.mxu0 0.0
    %684 = vmatprep.subr.mxu0 0.0
    %685 = vmatpush1.msra.mxu0 0.0
    %686 = vmatprep.subr.mxu0 0.0
    %687 = vmatpush1.msra.mxu0 0.0
    %688 = vmatprep.subr.mxu0 0.0
    %689 = vmatpush1.msra.mxu0 0.0
    %690 = vmatprep.subr.mxu0 0.0
    %691 = vmatpush1.msra.mxu0 0.0
    %692 = vmatprep.subr.mxu0 0.0
    %693 = vmatpush1.msra.mxu0 0.0
    %694 = vmatprep.subr.mxu0 0.0
    %695 = vmatpush1.msra.mxu0 0.0
    %696 = vmatprep.subr.mxu0 0.0
    %697 = vmatpush1.msra.mxu0 0.0
    %698 = vmatprep.subr.mxu0 0.0
    %699 = vmatpush1.msra.mxu0 0.0
    %700 = vmatprep.subr.mxu0 0.0
    %701 = vmatpush1.msra.mxu0 0.0
    %702 = vmatprep.subr.mxu0 0.0
    %703 = vmatpush1.msra.mxu0 0.0
    %704 = vmatprep.subr.mxu0 0.0
    %705 = vmatpush1.msra.mxu0 0.0
    %706 = vmatprep.subr.mxu0 0.0
    %707 = vmatpush1.msra.mxu0 0.0
    %708 = vmatprep.subr.mxu0 0.0
    %709 = vmatpush1.msra.mxu0 %v322
    %710 = vmatprep.subr.mxu0 0.0
    %711 = vmatpush1.msra.mxu0 %v321
    %712 = vmatprep.subr.mxu0 0.0
    %713 = vmatpush2.msra.mxu0 0.0
    %714 = vmatprep.subr.mxu0 0.0
    %715 = vmatpush2.msra.mxu0 0.0
    %716 = vmatprep.subr.mxu0 0.0
    %717 = vmatpush2.msra.mxu0 0.0
    %718 = vmatprep.subr.mxu0 0.0
    %719 = vmatpush2.msra.mxu0 0.0
    %720 = vmatprep.subr.mxu0 0.0
    %721 = vmatpush2.msra.mxu0 0.0
    %722 = vmatprep.subr.mxu0 0.0
    %723 = vmatpush2.msra.mxu0 0.0
    %724 = vmatprep.subr.mxu0 0.0
    %725 = vmatpush2.msra.mxu0 0.0
    %726 = vmatprep.subr.mxu0 0.0
    %727 = vmatpush2.msra.mxu0 0.0
    %728 = vmatprep.subr.mxu0 0.0
    %729 = vmatpush2.msra.mxu0 0.0
    %730 = vmatprep.subr.mxu0 0.0
    %731 = vmatpush2.msra.mxu0 0.0
    %732 = vmatprep.subr.mxu0 0.0
    %733 = vmatpush2.msra.mxu0 0.0
    %734 = vmatprep.subr.mxu0 0.0
    %735 = vmatpush2.msra.mxu0 0.0
    %736 = vmatprep.subr.mxu0 0.0
    %737 = vmatpush2.msra.mxu0 0.0
    %738 = vmatprep.subr.mxu0 0.0
    %739 = vmatpush2.msra.mxu0 0.0
    %740 = vmatprep.subr.mxu0 0.0
    %741 = vmatpush2.msra.mxu0 0.0
    %742 = vmatprep.subr.mxu0 0.0
    %743 = vmatpush2.msra.mxu0 0.0
    %744 = vmatprep.mubr.f32.mxu0 0.0
    %745 = vmatmul.mubr.f32.gmra.mxu0 %v678
    %v746 = vpop.f32.mrf.mxu0
    %v747 = vadd.f32 %v404, %v746
    %v748 = vpop.f32.mrf.mxu0
    %749 = vdwg.mxu0
    %vm750 = vcmask 408576
    %751 = vst.msk [vmem:[#allocation9] sm:$0xff] %vm750, %v747
    %752 = vst.msk [vmem:[#allocation11] sm:$0xff] %vm586, %v597
    %s753 = scalar_lea.vmem %s3, 32
    %v754 = vld [vmem:[%s753] sm:$0xff]
    %v755 = vld [vmem:[%s753 + $0x8] sm:$0xff]
    %v756 = vld [vmem:[%s753 + $0x10] sm:$0xff]
    %v757 = vld [vmem:[%s753 + $0x18] sm:$0xff]
    %758 = vmatprep.subr.mxu0 0.0
    %759 = vmatpush1.msra.mxu0 0.0
    %760 = vmatprep.subr.mxu0 0.0
    %761 = vmatpush1.msra.mxu0 0.0
    %762 = vmatprep.subr.mxu0 0.0
    %763 = vmatpush1.msra.mxu0 0.0
    %764 = vmatprep.subr.mxu0 0.0
    %765 = vmatpush1.msra.mxu0 0.0
    %766 = vmatprep.subr.mxu0 0.0
    %767 = vmatpush1.msra.mxu0 0.0
    %768 = vmatprep.subr.mxu0 0.0
    %769 = vmatpush1.msra.mxu0 0.0
    %770 = vmatprep.subr.mxu0 0.0
    %771 = vmatpush1.msra.mxu0 0.0
    %772 = vmatprep.subr.mxu0 0.0
    %773 = vmatpush1.msra.mxu0 0.0
    %774 = vmatprep.subr.mxu0 0.0
    %775 = vmatpush1.msra.mxu0 0.0
    %776 = vmatprep.subr.mxu0 0.0
    %777 = vmatpush1.msra.mxu0 0.0
    %778 = vmatprep.subr.mxu0 0.0
    %779 = vmatpush1.msra.mxu0 0.0
    %780 = vmatprep.subr.mxu0 0.0
    %781 = vmatpush1.msra.mxu0 0.0
    %782 = vmatprep.subr.mxu0 0.0
    %783 = vmatpush1.msra.mxu0 %v757
    %784 = vmatprep.subr.mxu0 0.0
    %785 = vmatpush1.msra.mxu0 %v756
    %786 = vmatprep.subr.mxu0 0.0
    %787 = vmatpush1.msra.mxu0 %v755
    %788 = vmatprep.subr.mxu0 0.0
    %789 = vmatpush1.msra.mxu0 %v754
    %790 = vmatprep.subr.mxu0 0.0
    %791 = vmatpush2.msra.mxu0 0.0
    %792 = vmatprep.subr.mxu0 0.0
    %793 = vmatpush2.msra.mxu0 0.0
    %794 = vmatprep.subr.mxu0 0.0
    %795 = vmatpush2.msra.mxu0 0.0
    %796 = vmatprep.subr.mxu0 0.0
    %797 = vmatpush2.msra.mxu0 0.0
    %798 = vmatprep.subr.mxu0 0.0
    %799 = vmatpush2.msra.mxu0 0.0
    %800 = vmatprep.subr.mxu0 0.0
    %801 = vmatpush2.msra.mxu0 0.0
    %802 = vmatprep.subr.mxu0 0.0
    %803 = vmatpush2.msra.mxu0 0.0
    %804 = vmatprep.subr.mxu0 0.0
    %805 = vmatpush2.msra.mxu0 0.0
    %806 = vmatprep.subr.mxu0 0.0
    %807 = vmatpush2.msra.mxu0 0.0
    %808 = vmatprep.subr.mxu0 0.0
    %809 = vmatpush2.msra.mxu0 0.0
    %810 = vmatprep.subr.mxu0 0.0
    %811 = vmatpush2.msra.mxu0 0.0
    %812 = vmatprep.subr.mxu0 0.0
    %813 = vmatpush2.msra.mxu0 0.0
    %814 = vmatprep.subr.mxu0 0.0
    %815 = vmatpush2.msra.mxu0 0.0
    %816 = vmatprep.subr.mxu0 0.0
    %817 = vmatpush2.msra.mxu0 0.0
    %818 = vmatprep.subr.mxu0 0.0
    %819 = vmatpush2.msra.mxu0 0.0
    %820 = vmatprep.subr.mxu0 0.0
    %821 = vmatpush2.msra.mxu0 0.0
    %822 = vmatprep.mubr.f32.mxu0 0.0
    %823 = vmatmul.mubr.f32.gmra.mxu0 %v432
    %v824 = vpop.f32.mrf.mxu0
    %v825 = vadd.f32 %v423, %v824
    %v826 = vpop.f32.mrf.mxu0
    %827 = vmatprep.mubr.f32.mxu0 0.0
    %828 = vmatmul.mubr.f32.gmra.mxu0 %v435
    %v829 = vpop.f32.mrf.mxu0
    %v830 = vadd.f32 %v428, %v829
    %v831 = vpop.f32.mrf.mxu0
    %832 = vdwg.mxu0
    %v833 = vld [vmem:[#allocation2 + $0x8] sm:$0xff]
    %v835 = vsel %vm330, %v833, 0
    %837 = vmatprep.subr.mxu0 0.0
    %838 = vmatpush1.msra.mxu0 0.0
    %839 = vmatprep.subr.mxu0 0.0
    %840 = vmatpush1.msra.mxu0 0.0
    %841 = vmatprep.subr.mxu0 0.0
    %842 = vmatpush1.msra.mxu0 0.0
    %843 = vmatprep.subr.mxu0 0.0
    %844 = vmatpush1.msra.mxu0 0.0
    %845 = vmatprep.subr.mxu0 0.0
    %846 = vmatpush1.msra.mxu0 0.0
    %847 = vmatprep.subr.mxu0 0.0
    %848 = vmatpush1.msra.mxu0 0.0
    %849 = vmatprep.subr.mxu0 0.0
    %850 = vmatpush1.msra.mxu0 0.0
    %851 = vmatprep.subr.mxu0 0.0
    %852 = vmatpush1.msra.mxu0 0.0
    %853 = vmatprep.subr.mxu0 0.0
    %854 = vmatpush1.msra.mxu0 0.0
    %855 = vmatprep.subr.mxu0 0.0
    %856 = vmatpush1.msra.mxu0 0.0
    %857 = vmatprep.subr.mxu0 0.0
    %858 = vmatpush1.msra.mxu0 0.0
    %859 = vmatprep.subr.mxu0 0.0
    %860 = vmatpush1.msra.mxu0 0.0
    %861 = vmatprep.subr.mxu0 0.0
    %862 = vmatpush1.msra.mxu0 0.0
    %863 = vmatprep.subr.mxu0 0.0
    %864 = vmatpush1.msra.mxu0 0.0
    %865 = vmatprep.subr.mxu0 0.0
    %866 = vmatpush1.msra.mxu0 %v830
    %867 = vmatprep.subr.mxu0 0.0
    %868 = vmatpush1.msra.mxu0 %v825
    %869 = vmatprep.subr.mxu0 0.0
    %870 = vmatpush2.msra.mxu0 0.0
    %871 = vmatprep.subr.mxu0 0.0
    %872 = vmatpush2.msra.mxu0 0.0
    %873 = vmatprep.subr.mxu0 0.0
    %874 = vmatpush2.msra.mxu0 0.0
    %875 = vmatprep.subr.mxu0 0.0
    %876 = vmatpush2.msra.mxu0 0.0
    %877 = vmatprep.subr.mxu0 0.0
    %878 = vmatpush2.msra.mxu0 0.0
    %879 = vmatprep.subr.mxu0 0.0
    %880 = vmatpush2.msra.mxu0 0.0
    %881 = vmatprep.subr.mxu0 0.0
    %882 = vmatpush2.msra.mxu0 0.0
    %883 = vmatprep.subr.mxu0 0.0
    %884 = vmatpush2.msra.mxu0 0.0
    %885 = vmatprep.subr.mxu0 0.0
    %886 = vmatpush2.msra.mxu0 0.0
    %887 = vmatprep.subr.mxu0 0.0
    %888 = vmatpush2.msra.mxu0 0.0
    %889 = vmatprep.subr.mxu0 0.0
    %890 = vmatpush2.msra.mxu0 0.0
    %891 = vmatprep.subr.mxu0 0.0
    %892 = vmatpush2.msra.mxu0 0.0
    %893 = vmatprep.subr.mxu0 0.0
    %894 = vmatpush2.msra.mxu0 0.0
    %895 = vmatprep.subr.mxu0 0.0
    %896 = vmatpush2.msra.mxu0 0.0
    %897 = vmatprep.subr.mxu0 0.0
    %898 = vmatpush2.msra.mxu0 0.0
    %899 = vmatprep.subr.mxu0 0.0
    %900 = vmatpush2.msra.mxu0 0.0
    %901 = vmatprep.mubr.f32.mxu0 0.0
    %902 = vmatmul.mubr.f32.gmra.mxu0 %v835
    %v903 = vpop.f32.mrf.mxu0
    %v904 = vadd.f32 0.0, %v903
    %v905 = vpop.f32.mrf.mxu0
    %906 = vdwg.mxu0
    %v907 = vsel %vm586, %v904, -inf
    %908 = vmax.xlane.f32.xlu0 %v907
    %v909 = vpop.xlane.xlu0 %908
    %v910 = vsub.f32 %v904, %v909
    %v911 = vmul.f32 %v910, 1.442695
    %v912 = vpow.pop %v911
    %v913 = vsel %vm586, %v912, 0.0
    %914 = vadd.xlane.f32.xlu0 %v913
    %v915 = vpop.xlane.xlu0 %914
    %v916 = vrcp.pop %v915
    %v917 = vmul.f32 %v912, %v916
    %v919 = vsel %vm586, %v917, 0
    %v922 = vsel %vm586, %v825, 0
    %v925 = vsel %vm586, %v830, 0
    %927 = vmatprep.subr.mxu0 0.0
    %928 = vmatpush1.xpose.msra.mxu0 0.0
    %929 = vmatprep.subr.mxu0 0.0
    %930 = vmatpush1.xpose.msra.mxu0 0.0
    %931 = vmatprep.subr.mxu0 0.0
    %932 = vmatpush1.xpose.msra.mxu0 0.0
    %933 = vmatprep.subr.mxu0 0.0
    %934 = vmatpush1.xpose.msra.mxu0 0.0
    %935 = vmatprep.subr.mxu0 0.0
    %936 = vmatpush1.xpose.msra.mxu0 0.0
    %937 = vmatprep.subr.mxu0 0.0
    %938 = vmatpush1.xpose.msra.mxu0 0.0
    %939 = vmatprep.subr.mxu0 0.0
    %940 = vmatpush1.xpose.msra.mxu0 0.0
    %941 = vmatprep.subr.mxu0 0.0
    %942 = vmatpush1.xpose.msra.mxu0 0.0
    %943 = vmatprep.subr.mxu0 0.0
    %944 = vmatpush1.xpose.msra.mxu0 0.0
    %945 = vmatprep.subr.mxu0 0.0
    %946 = vmatpush1.xpose.msra.mxu0 0.0
    %947 = vmatprep.subr.mxu0 0.0
    %948 = vmatpush1.xpose.msra.mxu0 0.0
    %949 = vmatprep.subr.mxu0 0.0
    %950 = vmatpush1.xpose.msra.mxu0 0.0
    %951 = vmatprep.subr.mxu0 0.0
    %952 = vmatpush1.xpose.msra.mxu0 0.0
    %953 = vmatprep.subr.mxu0 0.0
    %954 = vmatpush1.xpose.msra.mxu0 0.0
    %955 = vmatprep.subr.mxu0 0.0
    %956 = vmatpush1.xpose.msra.mxu0 %v925
    %957 = vmatprep.subr.mxu0 0.0
    %958 = vmatpush1.xpose.msra.mxu0 %v922
    %959 = vmatprep.subr.mxu0 0.0
    %960 = vmatpush2.xpose.msra.mxu0 0.0
    %961 = vmatprep.subr.mxu0 0.0
    %962 = vmatpush2.xpose.msra.mxu0 0.0
    %963 = vmatprep.subr.mxu0 0.0
    %964 = vmatpush2.xpose.msra.mxu0 0.0
    %965 = vmatprep.subr.mxu0 0.0
    %966 = vmatpush2.xpose.msra.mxu0 0.0
    %967 = vmatprep.subr.mxu0 0.0
    %968 = vmatpush2.xpose.msra.mxu0 0.0
    %969 = vmatprep.subr.mxu0 0.0
    %970 = vmatpush2.xpose.msra.mxu0 0.0
    %971 = vmatprep.subr.mxu0 0.0
    %972 = vmatpush2.xpose.msra.mxu0 0.0
    %973 = vmatprep.subr.mxu0 0.0
    %974 = vmatpush2.xpose.msra.mxu0 0.0
    %975 = vmatprep.subr.mxu0 0.0
    %976 = vmatpush2.xpose.msra.mxu0 0.0
    %977 = vmatprep.subr.mxu0 0.0
    %978 = vmatpush2.xpose.msra.mxu0 0.0
    %979 = vmatprep.subr.mxu0 0.0
    %980 = vmatpush2.xpose.msra.mxu0 0.0
    %981 = vmatprep.subr.mxu0 0.0
    %982 = vmatpush2.xpose.msra.mxu0 0.0
    %983 = vmatprep.subr.mxu0 0.0
    %984 = vmatpush2.xpose.msra.mxu0 0.0
    %985 = vmatprep.subr.mxu0 0.0
    %986 = vmatpush2.xpose.msra.mxu0 0.0
    %987 = vmatprep.subr.mxu0 0.0
    %988 = vmatpush2.xpose.msra.mxu0 0.0
    %989 = vmatprep.subr.mxu0 0.0
    %990 = vmatpush2.xpose.msra.mxu0 0.0
    %991 = vmatprep.mubr.f32.mxu0 0.0
    %992 = vmatmul.mubr.f32.gmra.mxu0 %v919
    %v993 = vpop.f32.mrf.mxu0
    %v994 = vadd.f32 0.0, %v993
    %v995 = vpop.f32.mrf.mxu0
    %996 = vdwg.mxu0
    %v998 = vsel %vm330, %v994, 0
    %1000 = vmatprep.subr.mxu0 0.0
    %1001 = vmatpush1.msra.mxu0 0.0
    %1002 = vmatprep.subr.mxu0 0.0
    %1003 = vmatpush1.msra.mxu0 0.0
    %1004 = vmatprep.subr.mxu0 0.0
    %1005 = vmatpush1.msra.mxu0 0.0
    %1006 = vmatprep.subr.mxu0 0.0
    %1007 = vmatpush1.msra.mxu0 0.0
    %1008 = vmatprep.subr.mxu0 0.0
    %1009 = vmatpush1.msra.mxu0 0.0
    %1010 = vmatprep.subr.mxu0 0.0
    %1011 = vmatpush1.msra.mxu0 0.0
    %1012 = vmatprep.subr.mxu0 0.0
    %1013 = vmatpush1.msra.mxu0 0.0
    %1014 = vmatprep.subr.mxu0 0.0
    %1015 = vmatpush1.msra.mxu0 0.0
    %1016 = vmatprep.subr.mxu0 0.0
    %1017 = vmatpush1.msra.mxu0 0.0
    %1018 = vmatprep.subr.mxu0 0.0
    %1019 = vmatpush1.msra.mxu0 0.0
    %1020 = vmatprep.subr.mxu0 0.0
    %1021 = vmatpush1.msra.mxu0 0.0
    %1022 = vmatprep.subr.mxu0 0.0
    %1023 = vmatpush1.msra.mxu0 0.0
    %1024 = vmatprep.subr.mxu0 0.0
    %1025 = vmatpush1.msra.mxu0 0.0
    %1026 = vmatprep.subr.mxu0 0.0
    %1027 = vmatpush1.msra.mxu0 0.0
    %1028 = vmatprep.subr.mxu0 0.0
    %1029 = vmatpush1.msra.mxu0 %v322
    %1030 = vmatprep.subr.mxu0 0.0
    %1031 = vmatpush1.msra.mxu0 %v321
    %1032 = vmatprep.subr.mxu0 0.0
    %1033 = vmatpush2.msra.mxu0 0.0
    %1034 = vmatprep.subr.mxu0 0.0
    %1035 = vmatpush2.msra.mxu0 0.0
    %1036 = vmatprep.subr.mxu0 0.0
    %1037 = vmatpush2.msra.mxu0 0.0
    %1038 = vmatprep.subr.mxu0 0.0
    %1039 = vmatpush2.msra.mxu0 0.0
    %1040 = vmatprep.subr.mxu0 0.0
    %1041 = vmatpush2.msra.mxu0 0.0
    %1042 = vmatprep.subr.mxu0 0.0
    %1043 = vmatpush2.msra.mxu0 0.0
    %1044 = vmatprep.subr.mxu0 0.0
    %1045 = vmatpush2.msra.mxu0 0.0
    %1046 = vmatprep.subr.mxu0 0.0
    %1047 = vmatpush2.msra.mxu0 0.0
    %1048 = vmatprep.subr.mxu0 0.0
    %1049 = vmatpush2.msra.mxu0 0.0
    %1050 = vmatprep.subr.mxu0 0.0
    %1051 = vmatpush2.msra.mxu0 0.0
    %1052 = vmatprep.subr.mxu0 0.0
    %1053 = vmatpush2.msra.mxu0 0.0
    %1054 = vmatprep.subr.mxu0 0.0
    %1055 = vmatpush2.msra.mxu0 0.0
    %1056 = vmatprep.subr.mxu0 0.0
    %1057 = vmatpush2.msra.mxu0 0.0
    %1058 = vmatprep.subr.mxu0 0.0
    %1059 = vmatpush2.msra.mxu0 0.0
    %1060 = vmatprep.subr.mxu0 0.0
    %1061 = vmatpush2.msra.mxu0 0.0
    %1062 = vmatprep.subr.mxu0 0.0
    %1063 = vmatpush2.msra.mxu0 0.0
    %1064 = vmatprep.mubr.f32.mxu0 0.0
    %1065 = vmatmul.mubr.f32.gmra.mxu0 %v998
    %v1066 = vpop.f32.mrf.mxu0
    %v1067 = vadd.f32 %v409, %v1066
    %v1068 = vpop.f32.mrf.mxu0
    %1069 = vdwg.mxu0
    %s1070 = scalar_lea.vmem [#allocation9], 8
    %1071 = vst.msk [vmem:[%s1070] sm:$0xff] %vm750, %v1067
    %s1072 = scalar_lea.vmem [#allocation11], 8
    %1073 = vst.msk [vmem:[%s1072] sm:$0xff] %vm586, %v917
    // Predicated region
    $region78: #{tpu_custom_call.1} parent=1 // pred_check
      _
    $region79: #{tpu_custom_call.1} parent=1 // pred_check_branch
      %1075 = sbr.rel (0) target = $region81
    $region80: #{tpu_custom_call.1} parent=1 // pred_region
      %s1077 = ssub.s32 256, 256
      %1078 = vsyncadd [#allocation10], %s1077
      %s1079 = sshll.u32 [#allocation9], 4
      %s1080 = int_to_ptr.vmem [resolvable:$true] %s1079
      %1085 = dma.vmem_to_hbm [thread:$0]  %s1080, 256, %s10, [#allocation10], 128, 128, 8
    $region81: #{tpu_custom_call.1} parent=1 // pred_fallthru
      _
    // Predicated region
    $region82: #{tpu_custom_call.1} parent=1 // pred_check
      _
    $region83: #{tpu_custom_call.1} parent=1 // pred_check_branch
      %1087 = sbr.rel (0) target = $region85
    $region84: #{tpu_custom_call.1} parent=1 // pred_region
      %s1089 = ssub.s32 256, 256
      %1090 = vsyncadd [#allocation12], %s1089
      %s1091 = sshll.u32 [#allocation11], 4
      %s1092 = int_to_ptr.vmem [resolvable:$true] %s1091
      %1097 = dma.vmem_to_hbm [thread:$0]  %s1092, 256, %s11, [#allocation12], 128, 128, 8
    $region85: #{tpu_custom_call.1} parent=1 // pred_fallthru
      _
    // Predicated region
    $region86: #{tpu_custom_call.1} parent=1 // pred_check
      _
    $region87: #{tpu_custom_call.1} parent=1 // pred_check_branch
      %1099 = sbr.rel (0) target = $region89
    $region88: #{tpu_custom_call.1} parent=1 // pred_region
      %1100 = dma.done [#allocation10], 256
    $region89: #{tpu_custom_call.1} parent=1 // pred_fallthru
      _
    // Predicated region
    $region90: #{tpu_custom_call.1} parent=1 // pred_check
      _
    $region91: #{tpu_custom_call.1} parent=1 // pred_check_branch
      %1102 = sbr.rel (0) target = $region93
    $region92: #{tpu_custom_call.1} parent=1 // pred_region
      %1103 = dma.done [#allocation12], 256
    $region93: #{tpu_custom_call.1} parent=1 // pred_fallthru
      _
    %1104 = vsyncpa [#allocation10], 1
    %1105 = vsyncpa [#allocation12], 1

</llo_original>
